<compile_context>
chip_gen: v7x
topology: tpu7x:2x2x1
jax: 0.10.0
libtpu: 0.0.40
codegen_flags: <defaults>
</compile_context>

<pallas_src>
import jax
import jax.numpy as jnp
from jax import lax
from jax.experimental import pallas as pl
from jax.experimental.pallas import tpu as pltpu


# ----------------------------- in-kernel helpers -----------------------------

def _conv3_rows(xp_ref, wb_ref, bt, h_out):
    """3x3 conv (stride 1) as 3 banded MXU matmuls over row-shifted views.

    xp_ref : (bt, h_out + 2, K) bf16 scratch; rows 0 and h_out+1 are zero.
    wb_ref : (3, K, N) bf16 banded weights (BN scale pre-folded).
    returns: (bt, h_out, N) f32
    """
    k = xp_ref.shape[2]
    n = wb_ref.shape[2]
    acc = None
    for kh in range(3):
        # (bt, h_out, K) -> (bt*h_out, K): free reshape (h_out % 8 == 0,
        # K % 128 == 0), gives a single matmul with M = bt*h_out.
        rows = xp_ref[:, kh:kh + h_out, :].reshape(bt * h_out, k)
        part = jnp.dot(rows, wb_ref[kh], preferred_element_type=jnp.float32)
        acc = part if acc is None else acc + part
    return acc.reshape(bt, h_out, n)


def _block_identity_kernel(x_ref, wb1_ref, wb2_ref, b1_ref, b2_ref,
                           o_ref, xp_ref, mp_ref):
    """Fused BasicBlock, identity shortcut, stride=1, B_TILE samples per step.

    x_ref : (bt, H, W*C) bf16      o_ref : (bt, H, W*C) bf16
    xp_ref: (bt, H+2, W*C) bf16    mp_ref: (bt, H+2, W*C) bf16 (VMEM scratch)
    """
    bt, h, k = x_ref.shape
    n = o_ref.shape[2]

    xv = x_ref[...]                                   # bf16, reused for shortcut
    # Row-padded conv1 input; borders re-zeroed every step (no cross-iteration
    # state -> safe with "parallel" grid semantics).
    xp_ref[:, 1:h + 1, :] = xv
    xp_ref[:, 0:1, :] = jnp.zeros((bt, 1, k), xp_ref.dtype)
    xp_ref[:, h + 1:h + 2, :] = jnp.zeros((bt, 1, k), xp_ref.dtype)

    mid = jnp.maximum(_conv3_rows(xp_ref, wb1_ref, bt, h) + b1_ref[...], 0.0)

    # conv2 input never leaves VMEM (stored as bf16).
    mp_ref[:, 1:h + 1, :] = mid.astype(mp_ref.dtype)
    mp_ref[:, 0:1, :] = jnp.zeros((bt, 1, n), mp_ref.dtype)
    mp_ref[:, h + 1:h + 2, :] = jnp.zeros((bt, 1, n), mp_ref.dtype)

    y = (_conv3_rows(mp_ref, wb2_ref, bt, h) + b2_ref[...]
         + xv.astype(jnp.float32))                     # identity shortcut
    o_ref[...] = jnp.maximum(y, 0.0).astype(o_ref.dtype)


def _block_downsample_kernel(x_ref, wa_ref, wb_ref, wb2_ref, sc_ref,
                             b1_ref, b2_ref, o_ref, xp_ref, mp_ref):
    """Fused BasicBlock, stride=2 conv1 + option-'A' shortcut, super-row layout.

    x_ref : (bt, H/2, 2*W*Cin) bf16  (super-rows: two image rows per row)
    wa_ref/wb_ref : (2*W*Cin, Wo*Cout) bf16   2-tap conv1 bands (stride baked in)
    sc_ref: (2*W*Cin, Wo*Cout) bf16   0/1 selection band for the 'A' shortcut
    """
    bt, _, k2 = x_ref.shape
    h_out = o_ref.shape[1]
    n = o_ref.shape[2]

    # Scratch row 0 is the zero "row -1" super-row (top padding only; stride-2
    # with pad-1 never reads past the last image row).
    xp_ref[:, 1:h_out + 1, :] = x_ref[...]
    xp_ref[:, 0:1, :] = jnp.zeros((bt, 1, k2), xp_ref.dtype)

    rows_a = xp_ref[:, 0:h_out, :].reshape(bt * h_out, k2)      # super-row r-1
    rows_b = xp_ref[:, 1:h_out + 1, :].reshape(bt * h_out, k2)  # super-row r

    acc1 = (jnp.dot(rows_a, wa_ref[...], preferred_element_type=jnp.float32)
            + jnp.dot(rows_b, wb_ref[...], preferred_element_type=jnp.float32))
    mid = jnp.maximum(acc1.reshape(bt, h_out, n) + b1_ref[...], 0.0)

    mp_ref[:, 1:h_out + 1, :] = mid.astype(mp_ref.dtype)
    mp_ref[:, 0:1, :] = jnp.zeros((bt, 1, n), mp_ref.dtype)
    mp_ref[:, h_out + 1:h_out + 2, :] = jnp.zeros((bt, 1, n), mp_ref.dtype)

    acc2 = _conv3_rows(mp_ref, wb2_ref, bt, h_out)
    # Option-'A' shortcut (::2 spatial subsample + zero channel pad) as one
    # matmul against a 0/1 selection band -- exact, no wrapper HBM pass.
    sc = jnp.dot(rows_b, sc_ref[...], preferred_element_type=jnp.float32)
    y = acc2 + b2_ref[...] + sc.reshape(bt, h_out, n)
    o_ref[...] = jnp.maximum(y, 0.0).astype(o_ref.dtype)


# ----------------------------- weight folding (trace-time) -------------------

def _fold_conv3x3_s1(w_oihw, width, scale, dtype=jnp.bfloat16):
    """OIHW 3x3 stride-1 conv weights -> banded (3, W*Cin, W*Cout), BN scale
    folded in f32 before the bf16 cast."""
    cout, cin = w_oihw.shape[0], w_oihw.shape[1]
    k = jnp.transpose(w_oihw, (2, 3, 1, 0)).astype(jnp.float32)   # (kh,kw,ci,co)
    k = k * scale.astype(jnp.float32)[None, None, None, :]
    band = jnp.zeros((3, width * cin, width * cout), jnp.float32)
    for wo in range(width):
        for kw in range(3):
            iw = wo + kw - 1
            if 0 <= iw < width:
                band = band.at[:, iw * cin:(iw + 1) * cin,
                               wo * cout:(wo + 1) * cout].set(k[:, kw])
    return band.astype(dtype)


def _fold_conv3x3_s2(w_oihw, w_in, scale, dtype=jnp.bfloat16):
    """Stride-2 conv as TWO bands over super-rows (lanes = 2*W_in*Cin).

    Output row r reads super-rows r-1 (tap A) and r (tap B):
      tap A, half 1 -> image row 2r-1 (kh=0)
      tap B, half 0 -> image row 2r   (kh=1);  half 1 -> row 2r+1 (kh=2)
    """
    cout, cin = w_oihw.shape[0], w_oihw.shape[1]
    w_out = w_in // 2
    half = w_in * cin
    k = jnp.transpose(w_oihw, (2, 3, 1, 0)).astype(jnp.float32)
    k = k * scale.astype(jnp.float32)[None, None, None, :]
    band_a = jnp.zeros((2 * w_in * cin, w_out * cout), jnp.float32)
    band_b = jnp.zeros((2 * w_in * cin, w_out * cout), jnp.float32)
    for wo in range(w_out):
        for kw in range(3):
            iw = 2 * wo + kw - 1
            if 0 <= iw < w_in:
                cols = slice(wo * cout, (wo + 1) * cout)
                band_a = band_a.at[half + iw * cin:half + (iw + 1) * cin,
                                   cols].set(k[0, kw])
                band_b = band_b.at[iw * cin:(iw + 1) * cin, cols].set(k[1, kw])
                band_b = band_b.at[half + iw * cin:half + (iw + 1) * cin,
                                   cols].set(k[2, kw])
    return band_a.astype(dtype), band_b.astype(dtype)


def _shortcut_band_option_a(w_in, cin, cout, dtype=jnp.bfloat16):
    """0/1 selection band: even rows (super-row half 0), even columns, channels
    placed at offset cout//4 -- F.pad(x[:, :, ::2, ::2], ..., planes//4)."""
    w_out = w_in // 2
    pad = cout // 4
    band = jnp.zeros((2 * w_in * cin, w_out * cout), jnp.float32)
    eye = jnp.eye(cin, dtype=jnp.float32)
    for wo in range(w_out):
        iw = 2 * wo
        band = band.at[iw * cin:(iw + 1) * cin,
                       wo * cout + pad:wo * cout + pad + cin].set(eye)
    return band.astype(dtype)


# ----------------------------- parameters ------------------------------------

def init_basic_block_params(key, in_planes, planes):
    k1, k2 = jax.random.split(key)
    w1 = 0.1 * jax.random.normal(k1, (planes, in_planes, 3, 3), jnp.float32)
    w2 = 0.1 * jax.random.normal(k2, (planes, planes, 3, 3), jnp.float32)

    def bn_fused(c, off):   # eval-mode BatchNorm folded to scale/bias
        eps = 1e-5
        gamma = 1.0 + 0.05 * jnp.arange(c, dtype=jnp.float32) + off
        beta = 0.02 * jnp.arange(c, dtype=jnp.float32) - off
        mean = 0.01 * jnp.arange(c, dtype=jnp.float32)
        var = 1.0 + 0.03 * jnp.arange(c, dtype=jnp.float32)
        scale = gamma / jnp.sqrt(var + eps)
        bias = beta - mean * scale
        return scale, bias

    s1, b1 = bn_fused(planes, 0.0)
    s2, b2 = bn_fused(planes, 0.1)
    return dict(w1=w1, w2=w2, s1=s1, b1=b1, s2=s2, b2=b2)


# ----------------------------- forward pass ----------------------------------

def basic_block_forward_folded(x_fold, params, in_planes, planes, h, w,
                               stride=1, option="A", batch_tile=None):
    """Primary API: lane-folded (N, H, W*Cin) bf16 in -> (N, Ho, Wo*planes)
    bf16 out.  Keep this layout between blocks in a full ResNet stack."""
    n = x_fold.shape[0]
    assert x_fold.shape == (n, h, w * in_planes), x_fold.shape
    x_fold = x_fold.astype(jnp.bfloat16)

    h_out = (h - 1) // stride + 1
    w_out = (w - 1) // stride + 1
    k_in = w * in_planes
    lanes = w_out * planes

    # Lane-dense layout assumptions (true for all ResNet-20 stages).
    assert k_in % 128 == 0 and lanes % 128 == 0, (k_in, lanes)
    assert h % 8 == 0 and h_out % 8 == 0, (h, h_out)

    if batch_tile is None:
        batch_tile = min(n, 8)
    assert n % batch_tile == 0, (n, batch_tile)
    grid = (n // batch_tile,)   # keep even when possible: feeds both v7x TCs

    def const_spec(a):
        nd = a.ndim
        return pl.BlockSpec(a.shape, lambda i, _nd=nd: (0,) * _nd)

    def per_lane(v):            # per-channel -> per-lane (wo*Cout + co order)
        return jnp.tile(v.astype(jnp.float32), w_out).reshape(1, lanes)

    b1 = per_lane(params["b1"])
    b2 = per_lane(params["b2"])
    wb2 = _fold_conv3x3_s1(params["w2"], w_out, params["s2"])

    o_spec = pl.BlockSpec((batch_tile, h_out, lanes), lambda i: (i, 0, 0))
    out_shape = jax.ShapeDtypeStruct((n, h_out, lanes), jnp.bfloat16)
    cparams = pltpu.CompilerParams(
        dimension_semantics=("parallel",),
        # Explicit override: v5e's scoped-VMEM default is only 16 MiB; 32 MiB
        # fits v5e/v6e and leaves headroom under v7x's 64 MiB physical VMEM
        # even at stage-1 ResNet shapes with batch_tile up to ~32.
        vmem_limit_bytes=32 * 1024 * 1024)

    if stride == 1 and in_planes == planes:
        wb1 = _fold_conv3x3_s1(params["w1"], w, params["s1"])
        return pl.pallas_call(
            _block_identity_kernel,
            out_shape=out_shape,
            grid=grid,
            in_specs=[pl.BlockSpec((batch_tile, h, k_in), lambda i: (i, 0, 0)),
                      const_spec(wb1), const_spec(wb2),
                      const_spec(b1), const_spec(b2)],
            out_specs=o_spec,
            scratch_shapes=[pltpu.VMEM((batch_tile, h + 2, k_in), jnp.bfloat16),
                            pltpu.VMEM((batch_tile, h + 2, lanes), jnp.bfloat16)],
            compiler_params=cparams,
        )(x_fold, wb1, wb2, b1, b2)

    if option != "A":
        # TODO(synk): option 'B' (1x1 conv + BN shortcut) not implemented.
        raise NotImplementedError("only option 'A' shortcut is implemented")
    assert stride == 2 and h % 2 == 0 and w % 2 == 0, (stride, h, w)
    assert in_planes + 2 * (planes // 4) == planes, (in_planes, planes)

    # Super-row view (free, contiguous reshape): two image rows per row.
    x_sup = x_fold.reshape(n, h // 2, 2 * k_in)
    wb1a, wb1b = _fold_conv3x3_s2(params["w1"], w, params["s1"])
    scb = _shortcut_band_option_a(w, in_planes, planes)

    return pl.pallas_call(
        _block_downsample_kernel,
        out_shape=out_shape,
        grid=grid,
        in_specs=[pl.BlockSpec((batch_tile, h // 2, 2 * k_in),
                               lambda i: (i, 0, 0)),
                  const_spec(wb1a), const_spec(wb1b), const_spec(wb2),
                  const_spec(scb), const_spec(b1), const_spec(b2)],
        out_specs=o_spec,
        scratch_shapes=[pltpu.VMEM((batch_tile, h_out + 1, 2 * k_in),
                                   jnp.bfloat16),
                        pltpu.VMEM((batch_tile, h_out + 2, lanes),
                                   jnp.bfloat16)],
        compiler_params=cparams,
    )(x_sup, wb1a, wb1b, wb2, scb, b1, b2)


def basic_block_forward(x_nchw, params, in_planes, planes, stride=1,
                        option="A", batch_tile=None):
    """Drop-in NCHW interface (PyTorch layout).  In a full ResNet keep the
    lane-folded bf16 layout between blocks and call the *_folded variant --
    the transposes here are boundary-only glue."""
    n, cin, h, w = x_nchw.shape
    assert cin == in_planes
    x_fold = jnp.transpose(x_nchw, (0, 2, 3, 1)).reshape(n, h, w * cin)
    out_fold = basic_block_forward_folded(x_fold, params, in_planes, planes,
                                          h, w, stride, option, batch_tile)
    h_out, lanes = out_fold.shape[1], out_fold.shape[2]
    w_out = lanes // planes
    out = out_fold.reshape(n, h_out, w_out, planes)
    return jnp.transpose(out, (0, 3, 1, 2))            # NHWC -> NCHW


# ----------------------------- reference (plain JAX, f32) --------------------

def reference_forward(x_nchw, p, in_planes, planes, stride=1):
    x = x_nchw.astype(jnp.float32)

    def conv(v, wgt, s):
        return lax.conv_general_dilated(
            v, wgt.astype(jnp.float32), (s, s), ((1, 1), (1, 1)),
            dimension_numbers=("NCHW", "OIHW", "NCHW"))

    def bn(y, s, b):
        return y * s.reshape(1, -1, 1, 1) + b.reshape(1, -1, 1, 1)

    out = jax.nn.relu(bn(conv(x, p["w1"], stride), p["s1"], p["b1"]))
    out = bn(conv(out, p["w2"], 1), p["s2"], p["b2"])
    if stride != 1 or in_planes != planes:
        sc = x[:, :, ::2, ::2]
        pad = planes // 4
        sc = jnp.pad(sc, ((0, 0), (pad, pad), (0, 0), (0, 0)))
    else:
        sc = x
    return jax.nn.relu(out + sc)


# ----------------------------- main -------------------------------------------

if __name__ == "__main__":
    key = jax.random.PRNGKey(0)
    kx, kp1, kp2 = jax.random.split(key, 3)

    n, h, w = 16, 16, 16
    in_planes = 8
    # Activations are bf16 (the block's working dtype); NCHW like PyTorch.
    x = jax.random.normal(kx, (n, in_planes, h, w),
                          jnp.float32).astype(jnp.bfloat16)

    # --- identity block: stride=1, in_planes == planes ------------------------
    planes = 8
    p1 = init_basic_block_params(kp1, in_planes, planes)
    out1 = jax.block_until_ready(
        basic_block_forward(x, p1, in_planes, planes, stride=1, batch_tile=8))
    ref1 = jax.block_until_ready(reference_forward(x, p1, in_planes, planes, 1))
    assert out1.shape == ref1.shape, (out1.shape, ref1.shape)
    err1 = float(jnp.max(jnp.abs(out1.astype(jnp.float32) - ref1)))
    # bf16 weights/intermediate/output vs. f32 reference -> few-percent-level.
    assert jnp.allclose(out1.astype(jnp.float32), ref1,
                        atol=1e-1, rtol=5e-2), err1

    # --- downsample block: stride=2, planes = 2*in_planes, option 'A' ---------
    planes = 16
    p2 = init_basic_block_params(kp2, in_planes, planes)
    out2 = jax.block_until_ready(
        basic_block_forward(x, p2, in_planes, planes, stride=2, batch_tile=8))
    ref2 = jax.block_until_ready(reference_forward(x, p2, in_planes, planes, 2))
    assert out2.shape == ref2.shape, (out2.shape, ref2.shape)
    err2 = float(jnp.max(jnp.abs(out2.astype(jnp.float32) - ref2)))
    assert jnp.allclose(out2.astype(jnp.float32), ref2,
                        atol=1e-1, rtol=5e-2), err2

    print("KERNEL_OK")
</pallas_src>

<mosaic_0001>
module attributes {stable_mosaic.version = 11 : i64} {
  func.func @_block_identity_kernel(%arg0: i32, %arg1: memref<8x16x128xbf16, #tpu.memory_space<vmem>>, %arg2: memref<3x128x128xbf16, #tpu.memory_space<vmem>>, %arg3: memref<3x128x128xbf16, #tpu.memory_space<vmem>>, %arg4: memref<1x128xf32, #tpu.memory_space<vmem>>, %arg5: memref<1x128xf32, #tpu.memory_space<vmem>>, %arg6: memref<8x16x128xbf16, #tpu.memory_space<vmem>>, %arg7: memref<8x18x128xbf16, #tpu.memory_space<vmem>>, %arg8: memref<8x18x128xbf16, #tpu.memory_space<vmem>>) attributes {dimension_semantics = [#tpu.dimension_semantics<parallel>], iteration_bounds = array<i64: 2>, scalar_prefetch = 0 : i64, scratch_operands = 2 : i64, tpu.core_type = #tpu.core_type<tc>, window_params = [{transform_indices = @transform_0, window_bounds = array<i64: 8, 16, 128>}, {pipeline_mode = #tpu.pipeline_mode<synchronous>, transform_indices = @transform_1, window_bounds = array<i64: 3, 128, 128>}, {pipeline_mode = #tpu.pipeline_mode<synchronous>, transform_indices = @transform_2, window_bounds = array<i64: 3, 128, 128>}, {pipeline_mode = #tpu.pipeline_mode<synchronous>, transform_indices = @transform_3, window_bounds = array<i64: 1, 128>}, {pipeline_mode = #tpu.pipeline_mode<synchronous>, transform_indices = @transform_4, window_bounds = array<i64: 1, 128>}, {transform_indices = @transform_5, window_bounds = array<i64: 8, 16, 128>}]} {
    %c0 = arith.constant 0 : index
    %c0_0 = arith.constant 0 : index
    %c0_1 = arith.constant 0 : index
    %0 = vector.load %arg1[%c0, %c0_0, %c0_1] : memref<8x16x128xbf16, #tpu.memory_space<vmem>>, vector<8x16x128xbf16>
    %c0_2 = arith.constant 0 : index
    %c1 = arith.constant 1 : index
    %c0_3 = arith.constant 0 : index
    %1 = vector.load %arg7[%c0_2, %c1, %c0_3] : memref<8x18x128xbf16, #tpu.memory_space<vmem>>, vector<8x16x128xbf16>
    tpu.vector_store %arg7[%c0_2, %c1, %c0_3], %0 {strides = array<i32>} : memref<8x18x128xbf16, #tpu.memory_space<vmem>>, vector<8x16x128xbf16>,
    %cst = arith.constant 0.000000e+00 : bf16
    %2 = vector.broadcast %cst : bf16 to vector<8x1x128xbf16>
    %c0_4 = arith.constant 0 : index
    %c0_5 = arith.constant 0 : index
    %c0_6 = arith.constant 0 : index
    %3 = vector.load %arg7[%c0_4, %c0_5, %c0_6] : memref<8x18x128xbf16, #tpu.memory_space<vmem>>, vector<8x1x128xbf16>
    tpu.vector_store %arg7[%c0_4, %c0_5, %c0_6], %2 {strides = array<i32>} : memref<8x18x128xbf16, #tpu.memory_space<vmem>>, vector<8x1x128xbf16>,
    %cst_7 = arith.constant 0.000000e+00 : bf16
    %4 = vector.broadcast %cst_7 : bf16 to vector<8x1x128xbf16>
    %c0_8 = arith.constant 0 : index
    %c17 = arith.constant 17 : index
    %c0_9 = arith.constant 0 : index
    %5 = vector.load %arg7[%c0_8, %c17, %c0_9] : memref<8x18x128xbf16, #tpu.memory_space<vmem>>, vector<8x1x128xbf16>
    tpu.vector_store %arg7[%c0_8, %c17, %c0_9], %4 {strides = array<i32>} : memref<8x18x128xbf16, #tpu.memory_space<vmem>>, vector<8x1x128xbf16>,
    %c0_10 = arith.constant 0 : index
    %c0_11 = arith.constant 0 : index
    %c0_12 = arith.constant 0 : index
    %6 = vector.load %arg7[%c0_10, %c0_11, %c0_12] : memref<8x18x128xbf16, #tpu.memory_space<vmem>>, vector<8x16x128xbf16>
    %7 = vector.shape_cast %6 : vector<8x16x128xbf16> to vector<128x128xbf16>
    %c0_13 = arith.constant 0 : index
    %c0_14 = arith.constant 0 : index
    %c0_15 = arith.constant 0 : index
    %8 = vector.load %arg2[%c0_13, %c0_14, %c0_15] : memref<3x128x128xbf16, #tpu.memory_space<vmem>>, vector<1x128x128xbf16>
    %9 = vector.shape_cast %8 : vector<1x128x128xbf16> to vector<128x128xbf16>
    %cst_16 = arith.constant dense<0.000000e+00> : vector<128x128xf32>
    %10 = tpu.matmul %7, %9, %cst_16 {dimension_numbers = #tpu.dot_dimension_numbers<[1], [0], [0], [1], [0, 0, 1, 1], [], []>} : vector<128x128xbf16>, vector<128x128xbf16>, vector<128x128xf32> -> vector<128x128xf32>
    %c0_17 = arith.constant 0 : index
    %c1_18 = arith.constant 1 : index
    %c0_19 = arith.constant 0 : index
    %11 = vector.load %arg7[%c0_17, %c1_18, %c0_19] : memref<8x18x128xbf16, #tpu.memory_space<vmem>>, vector<8x16x128xbf16>
    %12 = vector.shape_cast %11 : vector<8x16x128xbf16> to vector<128x128xbf16>
    %c1_20 = arith.constant 1 : index
    %c0_21 = arith.constant 0 : index
    %c0_22 = arith.constant 0 : index
    %13 = vector.load %arg2[%c1_20, %c0_21, %c0_22] : memref<3x128x128xbf16, #tpu.memory_space<vmem>>, vector<1x128x128xbf16>
    %14 = vector.shape_cast %13 : vector<1x128x128xbf16> to vector<128x128xbf16>
    %cst_23 = arith.constant dense<0.000000e+00> : vector<128x128xf32>
    %15 = tpu.matmul %12, %14, %cst_23 {dimension_numbers = #tpu.dot_dimension_numbers<[1], [0], [0], [1], [0, 0, 1, 1], [], []>} : vector<128x128xbf16>, vector<128x128xbf16>, vector<128x128xf32> -> vector<128x128xf32>
    %16 = arith.addf %10, %15 : vector<128x128xf32>
    %c0_24 = arith.constant 0 : index
    %c2 = arith.constant 2 : index
    %c0_25 = arith.constant 0 : index
    %17 = vector.load %arg7[%c0_24, %c2, %c0_25] : memref<8x18x128xbf16, #tpu.memory_space<vmem>>, vector<8x16x128xbf16>
    %18 = vector.shape_cast %17 : vector<8x16x128xbf16> to vector<128x128xbf16>
    %c2_26 = arith.constant 2 : index
    %c0_27 = arith.constant 0 : index
    %c0_28 = arith.constant 0 : index
    %19 = vector.load %arg2[%c2_26, %c0_27, %c0_28] : memref<3x128x128xbf16, #tpu.memory_space<vmem>>, vector<1x128x128xbf16>
    %20 = vector.shape_cast %19 : vector<1x128x128xbf16> to vector<128x128xbf16>
    %cst_29 = arith.constant dense<0.000000e+00> : vector<128x128xf32>
    %21 = tpu.matmul %18, %20, %cst_29 {dimension_numbers = #tpu.dot_dimension_numbers<[1], [0], [0], [1], [0, 0, 1, 1], [], []>} : vector<128x128xbf16>, vector<128x128xbf16>, vector<128x128xf32> -> vector<128x128xf32>
    %22 = arith.addf %16, %21 : vector<128x128xf32>
    %23 = vector.shape_cast %22 : vector<128x128xf32> to vector<8x16x128xf32>
    %c0_30 = arith.constant 0 : index
    %c0_31 = arith.constant 0 : index
    %24 = vector.load %arg4[%c0_30, %c0_31] : memref<1x128xf32, #tpu.memory_space<vmem>>, vector<1x128xf32>
    %25 = vector.shape_cast %24 : vector<1x128xf32> to vector<1x1x128xf32>
    %26 = vector.broadcast %25 : vector<1x1x128xf32> to vector<8x16x128xf32>
    %27 = arith.addf %23, %26 : vector<8x16x128xf32>
    %cst_32 = arith.constant 0.000000e+00 : f32
    %28 = vector.broadcast %cst_32 : f32 to vector<8x16x128xf32>
    %29 = arith.maximumf %27, %28 : vector<8x16x128xf32>
    %30 = arith.truncf %29 : vector<8x16x128xf32> to vector<8x16x128xbf16>
    %c0_33 = arith.constant 0 : index
    %c1_34 = arith.constant 1 : index
    %c0_35 = arith.constant 0 : index
    %31 = vector.load %arg8[%c0_33, %c1_34, %c0_35] : memref<8x18x128xbf16, #tpu.memory_space<vmem>>, vector<8x16x128xbf16>
    tpu.vector_store %arg8[%c0_33, %c1_34, %c0_35], %30 {strides = array<i32>} : memref<8x18x128xbf16, #tpu.memory_space<vmem>>, vector<8x16x128xbf16>,
    %cst_36 = arith.constant 0.000000e+00 : bf16
    %32 = vector.broadcast %cst_36 : bf16 to vector<8x1x128xbf16>
    %c0_37 = arith.constant 0 : index
    %c0_38 = arith.constant 0 : index
    %c0_39 = arith.constant 0 : index
    %33 = vector.load %arg8[%c0_37, %c0_38, %c0_39] : memref<8x18x128xbf16, #tpu.memory_space<vmem>>, vector<8x1x128xbf16>
    tpu.vector_store %arg8[%c0_37, %c0_38, %c0_39], %32 {strides = array<i32>} : memref<8x18x128xbf16, #tpu.memory_space<vmem>>, vector<8x1x128xbf16>,
    %cst_40 = arith.constant 0.000000e+00 : bf16
    %34 = vector.broadcast %cst_40 : bf16 to vector<8x1x128xbf16>
    %c0_41 = arith.constant 0 : index
    %c17_42 = arith.constant 17 : index
    %c0_43 = arith.constant 0 : index
    %35 = vector.load %arg8[%c0_41, %c17_42, %c0_43] : memref<8x18x128xbf16, #tpu.memory_space<vmem>>, vector<8x1x128xbf16>
    tpu.vector_store %arg8[%c0_41, %c17_42, %c0_43], %34 {strides = array<i32>} : memref<8x18x128xbf16, #tpu.memory_space<vmem>>, vector<8x1x128xbf16>,
    %c0_44 = arith.constant 0 : index
    %c0_45 = arith.constant 0 : index
    %c0_46 = arith.constant 0 : index
    %36 = vector.load %arg8[%c0_44, %c0_45, %c0_46] : memref<8x18x128xbf16, #tpu.memory_space<vmem>>, vector<8x16x128xbf16>
    %37 = vector.shape_cast %36 : vector<8x16x128xbf16> to vector<128x128xbf16>
    %c0_47 = arith.constant 0 : index
    %c0_48 = arith.constant 0 : index
    %c0_49 = arith.constant 0 : index
    %38 = vector.load %arg3[%c0_47, %c0_48, %c0_49] : memref<3x128x128xbf16, #tpu.memory_space<vmem>>, vector<1x128x128xbf16>
    %39 = vector.shape_cast %38 : vector<1x128x128xbf16> to vector<128x128xbf16>
    %cst_50 = arith.constant dense<0.000000e+00> : vector<128x128xf32>
    %40 = tpu.matmul %37, %39, %cst_50 {dimension_numbers = #tpu.dot_dimension_numbers<[1], [0], [0], [1], [0, 0, 1, 1], [], []>} : vector<128x128xbf16>, vector<128x128xbf16>, vector<128x128xf32> -> vector<128x128xf32>
    %c0_51 = arith.constant 0 : index
    %c1_52 = arith.constant 1 : index
    %c0_53 = arith.constant 0 : index
    %41 = vector.load %arg8[%c0_51, %c1_52, %c0_53] : memref<8x18x128xbf16, #tpu.memory_space<vmem>>, vector<8x16x128xbf16>
    %42 = vector.shape_cast %41 : vector<8x16x128xbf16> to vector<128x128xbf16>
    %c1_54 = arith.constant 1 : index
    %c0_55 = arith.constant 0 : index
    %c0_56 = arith.constant 0 : index
    %43 = vector.load %arg3[%c1_54, %c0_55, %c0_56] : memref<3x128x128xbf16, #tpu.memory_space<vmem>>, vector<1x128x128xbf16>
    %44 = vector.shape_cast %43 : vector<1x128x128xbf16> to vector<128x128xbf16>
    %cst_57 = arith.constant dense<0.000000e+00> : vector<128x128xf32>
    %45 = tpu.matmul %42, %44, %cst_57 {dimension_numbers = #tpu.dot_dimension_numbers<[1], [0], [0], [1], [0, 0, 1, 1], [], []>} : vector<128x128xbf16>, vector<128x128xbf16>, vector<128x128xf32> -> vector<128x128xf32>
    %46 = arith.addf %40, %45 : vector<128x128xf32>
    %c0_58 = arith.constant 0 : index
    %c2_59 = arith.constant 2 : index
    %c0_60 = arith.constant 0 : index
    %47 = vector.load %arg8[%c0_58, %c2_59, %c0_60] : memref<8x18x128xbf16, #tpu.memory_space<vmem>>, vector<8x16x128xbf16>
    %48 = vector.shape_cast %47 : vector<8x16x128xbf16> to vector<128x128xbf16>
    %c2_61 = arith.constant 2 : index
    %c0_62 = arith.constant 0 : index
    %c0_63 = arith.constant 0 : index
    %49 = vector.load %arg3[%c2_61, %c0_62, %c0_63] : memref<3x128x128xbf16, #tpu.memory_space<vmem>>, vector<1x128x128xbf16>
    %50 = vector.shape_cast %49 : vector<1x128x128xbf16> to vector<128x128xbf16>
    %cst_64 = arith.constant dense<0.000000e+00> : vector<128x128xf32>
    %51 = tpu.matmul %48, %50, %cst_64 {dimension_numbers = #tpu.dot_dimension_numbers<[1], [0], [0], [1], [0, 0, 1, 1], [], []>} : vector<128x128xbf16>, vector<128x128xbf16>, vector<128x128xf32> -> vector<128x128xf32>
    %52 = arith.addf %46, %51 : vector<128x128xf32>
    %53 = vector.shape_cast %52 : vector<128x128xf32> to vector<8x16x128xf32>
    %c0_65 = arith.constant 0 : index
    %c0_66 = arith.constant 0 : index
    %54 = vector.load %arg5[%c0_65, %c0_66] : memref<1x128xf32, #tpu.memory_space<vmem>>, vector<1x128xf32>
    %55 = vector.shape_cast %54 : vector<1x128xf32> to vector<1x1x128xf32>
    %56 = vector.broadcast %55 : vector<1x1x128xf32> to vector<8x16x128xf32>
    %57 = arith.addf %53, %56 : vector<8x16x128xf32>
    %58 = arith.extf %0 : vector<8x16x128xbf16> to vector<8x16x128xf32>
    %59 = arith.addf %57, %58 : vector<8x16x128xf32>
    %cst_67 = arith.constant 0.000000e+00 : f32
    %60 = vector.broadcast %cst_67 : f32 to vector<8x16x128xf32>
    %61 = arith.maximumf %59, %60 : vector<8x16x128xf32>
    %62 = arith.truncf %61 : vector<8x16x128xf32> to vector<8x16x128xbf16>
    %c0_68 = arith.constant 0 : index
    %c0_69 = arith.constant 0 : index
    %c0_70 = arith.constant 0 : index
    %63 = vector.load %arg6[%c0_68, %c0_69, %c0_70] : memref<8x16x128xbf16, #tpu.memory_space<vmem>>, vector<8x16x128xbf16>
    tpu.vector_store %arg6[%c0_68, %c0_69, %c0_70], %62 {strides = array<i32>} : memref<8x16x128xbf16, #tpu.memory_space<vmem>>, vector<8x16x128xbf16>,
    return
  }
  func.func @transform_0(%arg0: i32) -> (i32, i32, i32) {
    %c0_i32 = arith.constant 0 : i32
    %c0_i32_0 = arith.constant 0 : i32
    %c0_i32_1 = arith.constant 0 : i32
    return %arg0, %c0_i32, %c0_i32_0 : i32, i32, i32
  }
  func.func @transform_1(%arg0: i32) -> (i32, i32, i32) {
    %c0_i32 = arith.constant 0 : i32
    %c0_i32_0 = arith.constant 0 : i32
    %c0_i32_1 = arith.constant 0 : i32
    %c0_i32_2 = arith.constant 0 : i32
    return %c0_i32, %c0_i32_0, %c0_i32_1 : i32, i32, i32
  }
  func.func @transform_2(%arg0: i32) -> (i32, i32, i32) {
    %c0_i32 = arith.constant 0 : i32
    %c0_i32_0 = arith.constant 0 : i32
    %c0_i32_1 = arith.constant 0 : i32
    %c0_i32_2 = arith.constant 0 : i32
    return %c0_i32, %c0_i32_0, %c0_i32_1 : i32, i32, i32
  }
  func.func @transform_3(%arg0: i32) -> (i32, i32) {
    %c0_i32 = arith.constant 0 : i32
    %c0_i32_0 = arith.constant 0 : i32
    %c0_i32_1 = arith.constant 0 : i32
    return %c0_i32, %c0_i32_0 : i32, i32
  }
  func.func @transform_4(%arg0: i32) -> (i32, i32) {
    %c0_i32 = arith.constant 0 : i32
    %c0_i32_0 = arith.constant 0 : i32
    %c0_i32_1 = arith.constant 0 : i32
    return %c0_i32, %c0_i32_0 : i32, i32
  }
  func.func @transform_5(%arg0: i32) -> (i32, i32, i32) {
    %c0_i32 = arith.constant 0 : i32
    %c0_i32_0 = arith.constant 0 : i32
    %c0_i32_1 = arith.constant 0 : i32
    return %arg0, %c0_i32, %c0_i32_0 : i32, i32, i32
  }
}

</mosaic_0001>

<llo_original>
// kernel: tpu_custom_call.1
$region0: #{tpu_custom_call.1}
  #allocation0 [shape = 'u32[]', space=smem, size = 0x4, offset = 0x4, fixed_abs, tag = 'smem constant byte address 0x4 - core index']
  #allocation1 [shape = 'u32[144,128]{1,0:T(1,128)}', space=vmem, size = 0x12000, scoped, tag = 'internal scratch']
  #allocation2 [shape = 'bf16[8,18,128]{2,1,0:T(8,128)(2,1)}', space=vmem, size = 0xc000, scoped, tag = 'scratch operand']
  #allocation3 [shape = 'bf16[8,18,128]{2,1,0:T(8,128)(2,1)}', space=vmem, size = 0xc000, scoped, tag = 'scratch operand']
  %s0 = inlined_call_operand.hbm [shape: bf16[16,16,128], index: 0, kind: input, shape index: {}]
  %s1 = inlined_call_operand.hbm [shape: bf16[3,128,128], index: 1, kind: input, shape index: {}]
  %s2 = inlined_call_operand.hbm [shape: bf16[3,128,128], index: 2, kind: input, shape index: {}]
  %s3 = inlined_call_operand.vmem [shape: f32[1,128], index: 3, kind: input, shape index: {}]
  %s4 = inlined_call_operand.vmem [shape: f32[1,128], index: 4, kind: input, shape index: {}]
  %s5 = inlined_call_operand.hbm [shape: bf16[16,16,128], index: 5, kind: output, shape index: {}]
  %s6 = sld [smem:[#allocation0]]
  $region65: #{tpu_custom_call.1} parent=0
    _
  %s8 = ssub.s32 1, %s6
  %s9 = scalar_select 0, %s8, %s6
  $region1: #{tpu_custom_call.1} parent=0
    #allocation4 [shape = 'u8[65536]{0}', space=vmem, size = 0x10000, scoped, tag = 'input window, operand 0']
    #allocation5 [shape = 's32[2]{0}', space=sflag, size = 0x8, scoped, tag = 'scoped memory for tpu_custom_call.1']
    #allocation6 [shape = 's32[2]{0}', space=sflag, size = 0x8, scoped, tag = 'scoped memory for tpu_custom_call.1']
    #allocation7 [shape = 'u8[98304]{0}', space=vmem, size = 0x18000, scoped, tag = 'input window, operand 1, single buffered']
    #allocation8 [shape = 's32[1]{0}', space=sflag, size = 0x4, scoped, tag = 'scoped memory for tpu_custom_call.1']
    #allocation9 [shape = 'u8[98304]{0}', space=vmem, size = 0x18000, scoped, tag = 'input window, operand 2, single buffered']
    #allocation10 [shape = 'u8[65536]{0}', space=vmem, size = 0x10000, scoped, tag = 'output window, operand 0']
    %10 = vsyncpa [#allocation5], 0
    %s11 = scalar_lea.sflag [#allocation5], 1
    %12 = vsyncpa %s11, 0
    %13 = vsyncpa [#allocation8], 0
    %14 = vsyncpa [#allocation6], 0
    %s15 = scalar_lea.sflag [#allocation6], 1
    %16 = vsyncpa %s15, 0
    loop: start=0, step=1, limit=4
    $region2: #{tpu_custom_call.1} parent=1 // loop_pre_header
      _
    $region3: #{tpu_custom_call.1} parent=1 // loop_header
      %s18 = sphi 0, %s22
      %p19 = scmp.ge.s32.totalorder %s18, 4
      %s28 = sphi 0, %s30
      %s31 = sphi 0, %s28
      %s32 = sphi 0, %s31
      %s48 = sphi 0, %s32
      %s52 = sphi 0, %s52
      %s54 = sphi 0, %s52
      %s55 = sphi 0, %s54
      %s69 = sphi 0, %s55
      %s73 = sphi 0, %s73
      %s75 = sphi 0, %s73
      %s76 = sphi 0, %s75
      %s90 = sphi 0, %s76
      %s94 = sphi 0, %s94
      %s96 = sphi 0, %s94
      %s97 = sphi 0, %s96
      %s111 = sphi 0, %s97
      %s115 = sphi 0, %s115
      %s117 = sphi 0, %s115
      %s118 = sphi 0, %s117
      %s132 = sphi 0, %s118
      %s138 = sphi 0, %s140
      %s141 = sphi 0, %s138
      %s142 = sphi 0, %s141
      %s158 = sphi 0, %s142
    $region4: #{tpu_custom_call.1} parent=1 // loop_header_branch
      %21 = sbr.rel (%p19) target = $region8
    $region5: #{tpu_custom_call.1} parent=1 // loop_body
      %s23 = ssub.s32 %s18, 1
      %s24 = ssub.s32 %s18, 2
      %s25 = sadd.s32 %s18, 1
      %s26 = ssub.s32 %s18, %s25
      %p27 = scmp.eq.s32.totalorder %s26, 0
      %s29 = sadd.s32 %s28, 1
      %s30 = scalar_select %p27, %s28, %s29
      %p33 = pneg %p27
      %p34 = scmp.eq.s32.totalorder %s18, 1
      %p35 = por %p33, %p34
      %p36 = scmp.ne.s32.totalorder %s28, %s31
      %p37 = scmp.eq.s32.totalorder %s18, 0
      %p38 = por %p36, %p37
      %p39 = scmp.ne.s32.totalorder %s28, %s31
      %p40 = scmp.eq.s32.totalorder %s23, 1
      %p41 = por %p39, %p40
      %p42 = scmp.ne.s32.totalorder %s31, %s32
      %p43 = scmp.eq.s32.totalorder %s23, 0
      %p44 = por %p42, %p43
      %p45 = scmp.ne.s32.totalorder %s31, %s32
      %p46 = scmp.eq.s32.totalorder %s24, 1
      %p47 = por %p45, %p46
      %p49 = scmp.ne.s32.totalorder %s32, %s48
      %p50 = scmp.eq.s32.totalorder %s24, 0
      %p51 = por %p49, %p50
      %s53 = sadd.s32 %s52, 1
      %p56 = scmp.eq.s32.totalorder %s18, 1
      %p57 = scmp.ne.s32.totalorder %s52, %s54
      %p58 = scmp.eq.s32.totalorder %s18, 0
      %p59 = por %p57, %p58
      %p60 = scmp.ne.s32.totalorder %s52, %s54
      %p61 = scmp.eq.s32.totalorder %s23, 1
      %p62 = por %p60, %p61
      %p63 = scmp.ne.s32.totalorder %s54, %s55
      %p64 = scmp.eq.s32.totalorder %s23, 0
      %p65 = por %p63, %p64
      %p66 = scmp.ne.s32.totalorder %s54, %s55
      %p67 = scmp.eq.s32.totalorder %s24, 1
      %p68 = por %p66, %p67
      %p70 = scmp.ne.s32.totalorder %s55, %s69
      %p71 = scmp.eq.s32.totalorder %s24, 0
      %p72 = por %p70, %p71
      %s74 = sadd.s32 %s73, 1
      %p77 = scmp.eq.s32.totalorder %s18, 1
      %p78 = scmp.ne.s32.totalorder %s73, %s75
      %p79 = scmp.eq.s32.totalorder %s18, 0
      %p80 = por %p78, %p79
      %p81 = scmp.ne.s32.totalorder %s73, %s75
      %p82 = scmp.eq.s32.totalorder %s23, 1
      %p83 = por %p81, %p82
      %p84 = scmp.ne.s32.totalorder %s75, %s76
      %p85 = scmp.eq.s32.totalorder %s23, 0
      %p86 = por %p84, %p85
      %p87 = scmp.ne.s32.totalorder %s75, %s76
      %p88 = scmp.eq.s32.totalorder %s24, 1
      %p89 = por %p87, %p88
      %p91 = scmp.ne.s32.totalorder %s76, %s90
      %p92 = scmp.eq.s32.totalorder %s24, 0
      %p93 = por %p91, %p92
      %s95 = sadd.s32 %s94, 1
      %p98 = scmp.eq.s32.totalorder %s18, 1
      %p99 = scmp.ne.s32.totalorder %s94, %s96
      %p100 = scmp.eq.s32.totalorder %s18, 0
      %p101 = por %p99, %p100
      %p102 = scmp.ne.s32.totalorder %s94, %s96
      %p103 = scmp.eq.s32.totalorder %s23, 1
      %p104 = por %p102, %p103
      %p105 = scmp.ne.s32.totalorder %s96, %s97
      %p106 = scmp.eq.s32.totalorder %s23, 0
      %p107 = por %p105, %p106
      %p108 = scmp.ne.s32.totalorder %s96, %s97
      %p109 = scmp.eq.s32.totalorder %s24, 1
      %p110 = por %p108, %p109
      %p112 = scmp.ne.s32.totalorder %s97, %s111
      %p113 = scmp.eq.s32.totalorder %s24, 0
      %p114 = por %p112, %p113
      %s116 = sadd.s32 %s115, 1
      %p119 = scmp.eq.s32.totalorder %s18, 1
      %p120 = scmp.ne.s32.totalorder %s115, %s117
      %p121 = scmp.eq.s32.totalorder %s18, 0
      %p122 = por %p120, %p121
      %p123 = scmp.ne.s32.totalorder %s115, %s117
      %p124 = scmp.eq.s32.totalorder %s23, 1
      %p125 = por %p123, %p124
      %p126 = scmp.ne.s32.totalorder %s117, %s118
      %p127 = scmp.eq.s32.totalorder %s23, 0
      %p128 = por %p126, %p127
      %p129 = scmp.ne.s32.totalorder %s117, %s118
      %p130 = scmp.eq.s32.totalorder %s24, 1
      %p131 = por %p129, %p130
      %p133 = scmp.ne.s32.totalorder %s118, %s132
      %p134 = scmp.eq.s32.totalorder %s24, 0
      %p135 = por %p133, %p134
      %s136 = ssub.s32 %s18, %s25
      %p137 = scmp.eq.s32.totalorder %s136, 0
      %s139 = sadd.s32 %s138, 1
      %s140 = scalar_select %p137, %s138, %s139
      %p143 = pneg %p137
      %p144 = scmp.eq.s32.totalorder %s18, 1
      %p145 = por %p143, %p144
      %p146 = scmp.ne.s32.totalorder %s138, %s141
      %p147 = scmp.eq.s32.totalorder %s18, 0
      %p148 = por %p146, %p147
      %p149 = scmp.ne.s32.totalorder %s138, %s141
      %p150 = scmp.eq.s32.totalorder %s23, 1
      %p151 = por %p149, %p150
      %p152 = scmp.ne.s32.totalorder %s141, %s142
      %p153 = scmp.eq.s32.totalorder %s23, 0
      %p154 = por %p152, %p153
      %p155 = scmp.ne.s32.totalorder %s141, %s142
      %p156 = scmp.eq.s32.totalorder %s24, 1
      %p157 = por %p155, %p156
      %p159 = scmp.ne.s32.totalorder %s142, %s158
      %p160 = scmp.eq.s32.totalorder %s24, 0
      %p161 = por %p159, %p160
      %p162 = scmp.le.s32.totalorder 1, %s18
      %p163 = scmp.lt.s32.totalorder %s18, 3
      %p164 = pnand %p162, %p163
      %p165 = pneg %p164
      // Predicated region
      $region9: #{tpu_custom_call.1} parent=5 // pred_check
        _
      $region10: #{tpu_custom_call.1} parent=5 // pred_check_branch
        %167 = sbr.rel (%p164) target = $region12
      $region11: #{tpu_custom_call.1} parent=5 // pred_region
        %s168 = ssub.s32 %s18, 1
        // Predicated region
        $region13: #{tpu_custom_call.1} parent=11 // pred_check
          %p169 = pneg %p65
        $region14: #{tpu_custom_call.1} parent=11 // pred_check_branch
          %171 = sbr.rel (%p169) target = $region16
        $region15: #{tpu_custom_call.1} parent=11 // pred_region
          %s173 = ssub.s32 3072, 3072
          %174 = vsyncadd [#allocation8], %s173
          %s175 = sshll.u32 [#allocation7], 4
          %s176 = int_to_ptr.vmem [resolvable:$true] %s175
          %181 = dma.hbm_to_vmem [thread:$0]  %s1, 3072, %s176, [#allocation8], 64, 64, 4
        $region16: #{tpu_custom_call.1} parent=11 // pred_fallthru
          _
        // Predicated region
        $region17: #{tpu_custom_call.1} parent=11 // pred_check
          %p182 = pneg %p86
        $region18: #{tpu_custom_call.1} parent=11 // pred_check_branch
          %184 = sbr.rel (%p182) target = $region20
        $region19: #{tpu_custom_call.1} parent=11 // pred_region
          %s186 = ssub.s32 3072, 3072
          %187 = vsyncadd [#allocation8], %s186
          %s188 = sshll.u32 [#allocation9], 4
          %s189 = int_to_ptr.vmem [resolvable:$true] %s188
          %194 = dma.hbm_to_vmem [thread:$0]  %s2, 3072, %s189, [#allocation8], 64, 64, 4
        $region20: #{tpu_custom_call.1} parent=11 // pred_fallthru
          _
        // Predicated region
        $region21: #{tpu_custom_call.1} parent=11 // pred_check
          %p195 = pneg %p107
        $region22: #{tpu_custom_call.1} parent=11 // pred_check_branch
          %197 = sbr.rel (%p195) target = $region24
        $region23: #{tpu_custom_call.1} parent=11 // pred_region
          _
        $region24: #{tpu_custom_call.1} parent=11 // pred_fallthru
          _
        // Predicated region
        $region25: #{tpu_custom_call.1} parent=11 // pred_check
          %p198 = pneg %p128
        $region26: #{tpu_custom_call.1} parent=11 // pred_check_branch
          %200 = sbr.rel (%p198) target = $region28
        $region27: #{tpu_custom_call.1} parent=11 // pred_region
          _
        $region28: #{tpu_custom_call.1} parent=11 // pred_fallthru
          _
      $region12: #{tpu_custom_call.1} parent=5 // pred_fallthru
        _
      %p201 = scmp.lt.s32.totalorder %s18, 2
      // Predicated region
      $region29: #{tpu_custom_call.1} parent=5 // pred_check
        %p202 = pneg %p201
      $region30: #{tpu_custom_call.1} parent=5 // pred_check_branch
        %204 = sbr.rel (%p202) target = $region32
      $region31: #{tpu_custom_call.1} parent=5 // pred_region
        // Predicated region
        $region33: #{tpu_custom_call.1} parent=31 // pred_check
          %p205 = pneg %p38
        $region34: #{tpu_custom_call.1} parent=31 // pred_check_branch
          %207 = sbr.rel (%p205) target = $region36
        $region35: #{tpu_custom_call.1} parent=31 // pred_region
          %s208 = sand.u32 %s28, 1
          %s209 = scalar_lea.sflag [#allocation5], %s208
          %s210 = sand.u32 %s28, 1
          %s211 = smul.addr %s210, 64
          %s212 = scalar_lea.vmem [#allocation4], %s211
          %s213 = smul.u32 8, %s18
          %s215 = ssub.s32 1024, 1024
          %216 = vsyncadd %s209, %s215
          %s217 = smul.addr %s213, 2
          %s218 = smul.addr %s217, 64
          %s219 = scalar_lea.hbm %s0, %s218
          %s220 = sshll.u32 %s212, 4
          %s221 = int_to_ptr.vmem [resolvable:$true] %s220
          %226 = dma.hbm_to_vmem [thread:$0]  %s219, 1024, %s221, %s209, 64, 64, 4
        $region36: #{tpu_custom_call.1} parent=31 // pred_fallthru
          _
      $region32: #{tpu_custom_call.1} parent=5 // pred_fallthru
        _
      %p227 = scmp.le.s32.totalorder 1, %s18
      %p228 = scmp.lt.s32.totalorder %s18, 3
      %p229 = pnand %p227, %p228
      %p230 = pneg %p229
      // Predicated region
      $region37: #{tpu_custom_call.1} parent=5 // pred_check
        _
      $region38: #{tpu_custom_call.1} parent=5 // pred_check_branch
        %232 = sbr.rel (%p229) target = $region40
      $region39: #{tpu_custom_call.1} parent=5 // pred_region
        %s233 = ssub.s32 %s18, 1
        %s234 = sand.u32 %s31, 1
        %s235 = scalar_lea.sflag [#allocation5], %s234
        %s236 = sand.u32 %s31, 1
        %s237 = smul.addr %s236, 64
        %s238 = scalar_lea.vmem [#allocation4], %s237
        // Predicated region
        $region41: #{tpu_custom_call.1} parent=39 // pred_check
          %p239 = pneg %p44
        $region42: #{tpu_custom_call.1} parent=39 // pred_check_branch
          %241 = sbr.rel (%p239) target = $region44
        $region43: #{tpu_custom_call.1} parent=39 // pred_region
          %242 = dma.done %s235, 1024
        $region44: #{tpu_custom_call.1} parent=39 // pred_fallthru
          _
        // Predicated region
        $region45: #{tpu_custom_call.1} parent=39 // pred_check
          %p243 = pneg %p65
        $region46: #{tpu_custom_call.1} parent=39 // pred_check_branch
          %245 = sbr.rel (%p243) target = $region48
        $region47: #{tpu_custom_call.1} parent=39 // pred_region
          %246 = dma.done [#allocation8], 3072
        $region48: #{tpu_custom_call.1} parent=39 // pred_fallthru
          _
        // Predicated region
        $region49: #{tpu_custom_call.1} parent=39 // pred_check
          %p247 = pneg %p86
        $region50: #{tpu_custom_call.1} parent=39 // pred_check_branch
          %249 = sbr.rel (%p247) target = $region52
        $region51: #{tpu_custom_call.1} parent=39 // pred_region
          %250 = dma.done [#allocation8], 3072
        $region52: #{tpu_custom_call.1} parent=39 // pred_fallthru
          _
        %s251 = sand.u32 %s31, 1
        %s252 = scalar_lea.sflag [#allocation5], %s251
        %s253 = sand.u32 %s31, 1
        %s254 = smul.addr %s253, 64
        %s255 = scalar_lea.vmem [#allocation4], %s254
        %p256 = pneg %p44
        %p257 = pneg %p41
        %p258 = pneg %p65
        %p259 = pneg %p62
        %p260 = pneg %p86
        %p261 = pneg %p83
        %p262 = pneg %p107
        %p263 = pneg %p104
        %p264 = pneg %p128
        %p265 = pneg %p125
        %p266 = pneg %p154
        %p267 = pneg %p151
        %s268 = sand.u32 %s141, 1
        %s269 = scalar_lea.sflag [#allocation6], %s268
        %s270 = sand.u32 %s141, 1
        %s271 = smul.addr %s270, 64
        %s272 = scalar_lea.vmem [#allocation10], %s271
        %s273 = smul.u32 8, %s23
        %s274 = smul.u32 8, %s23
        %v276 = vld [vmem:[%s238] sm:$0xf]
        %v277 = vld [vmem:[%s238 + $0x4] sm:$0xf]
        %v278 = vld [vmem:[%s238 + $0x8] sm:$0xf]
        %v279 = vld [vmem:[%s238 + $0xc] sm:$0xf]
        %v280 = vld [vmem:[%s238 + $0x10] sm:$0xf]
        %v281 = vld [vmem:[%s238 + $0x14] sm:$0xf]
        %v282 = vld [vmem:[%s238 + $0x18] sm:$0xf]
        %v283 = vld [vmem:[%s238 + $0x1c] sm:$0xf]
        %v284 = vld [vmem:[%s238 + $0x20] sm:$0xf]
        %v285 = vld [vmem:[%s238 + $0x24] sm:$0xf]
        %v286 = vld [vmem:[%s238 + $0x28] sm:$0xf]
        %v287 = vld [vmem:[%s238 + $0x2c] sm:$0xf]
        %v288 = vld [vmem:[%s238 + $0x30] sm:$0xf]
        %v289 = vld [vmem:[%s238 + $0x34] sm:$0xf]
        %v290 = vld [vmem:[%s238 + $0x38] sm:$0xf]
        %v291 = vld [vmem:[%s238 + $0x3c] sm:$0xf]
        %vm292 = vsmask.f32 256
        %vm293 = vsmask.f32 4368
        %vm294 = vmor %vm292, %vm293
        %v296 = vshrl.u32 %v276, 16
        %v298 = vrot.slane %v296, 7
        %v299 = vshll.u32 %v276, 16
        %v301 = vor.u32 %v298, %v299
        %v302 = vrot.slane %v298, 4
        %v304 = vshrl.u32 %v277, 16
        %v306 = vrot.slane %v304, 7
        %v307 = vshll.u32 %v277, 16
        %v309 = vor.u32 %v306, %v307
        %v310 = vsel %vm294, %v302, %v309
        %v311 = vrot.slane %v306, 4
        %v313 = vshrl.u32 %v278, 16
        %v315 = vrot.slane %v313, 7
        %v316 = vshll.u32 %v278, 16
        %v318 = vor.u32 %v315, %v316
        %v319 = vrot.slane %v315, 4
        %v321 = vshrl.u32 %v279, 16
        %v323 = vrot.slane %v321, 7
        %v324 = vshll.u32 %v279, 16
        %v326 = vor.u32 %v323, %v324
        %v327 = vsel %vm294, %v319, %v326
        %v328 = vrot.slane %v323, 4
        %v330 = vshrl.u32 %v280, 16
        %v332 = vrot.slane %v330, 7
        %v333 = vshll.u32 %v280, 16
        %v335 = vor.u32 %v332, %v333
        %v336 = vrot.slane %v332, 4
        %v338 = vshrl.u32 %v281, 16
        %v340 = vrot.slane %v338, 7
        %v341 = vshll.u32 %v281, 16
        %v343 = vor.u32 %v340, %v341
        %v344 = vsel %vm294, %v336, %v343
        %v345 = vrot.slane %v340, 4
        %v347 = vshrl.u32 %v282, 16
        %v349 = vrot.slane %v347, 7
        %v350 = vshll.u32 %v282, 16
        %v352 = vor.u32 %v349, %v350
        %v353 = vrot.slane %v349, 4
        %v355 = vshrl.u32 %v283, 16
        %v357 = vrot.slane %v355, 7
        %v358 = vshll.u32 %v283, 16
        %v360 = vor.u32 %v357, %v358
        %v361 = vsel %vm294, %v353, %v360
        %v362 = vrot.slane %v357, 4
        %v364 = vshrl.u32 %v284, 16
        %v366 = vrot.slane %v364, 7
        %v367 = vshll.u32 %v284, 16
        %v369 = vor.u32 %v366, %v367
        %v370 = vrot.slane %v366, 4
        %v372 = vshrl.u32 %v285, 16
        %v374 = vrot.slane %v372, 7
        %v375 = vshll.u32 %v285, 16
        %v377 = vor.u32 %v374, %v375
        %v378 = vsel %vm294, %v370, %v377
        %v379 = vrot.slane %v374, 4
        %v381 = vshrl.u32 %v286, 16
        %v383 = vrot.slane %v381, 7
        %v384 = vshll.u32 %v286, 16
        %v386 = vor.u32 %v383, %v384
        %v387 = vrot.slane %v383, 4
        %v389 = vshrl.u32 %v287, 16
        %v391 = vrot.slane %v389, 7
        %v392 = vshll.u32 %v287, 16
        %v394 = vor.u32 %v391, %v392
        %v395 = vsel %vm294, %v387, %v394
        %v396 = vrot.slane %v391, 4
        %v398 = vshrl.u32 %v288, 16
        %v400 = vrot.slane %v398, 7
        %v401 = vshll.u32 %v288, 16
        %v403 = vor.u32 %v400, %v401
        %v404 = vrot.slane %v400, 4
        %v406 = vshrl.u32 %v289, 16
        %v408 = vrot.slane %v406, 7
        %v409 = vshll.u32 %v289, 16
        %v411 = vor.u32 %v408, %v409
        %v412 = vsel %vm294, %v404, %v411
        %v413 = vrot.slane %v408, 4
        %v415 = vshrl.u32 %v290, 16
        %v417 = vrot.slane %v415, 7
        %v418 = vshll.u32 %v290, 16
        %v420 = vor.u32 %v417, %v418
        %v421 = vrot.slane %v417, 4
        %v423 = vshrl.u32 %v291, 16
        %v425 = vrot.slane %v423, 7
        %v426 = vshll.u32 %v291, 16
        %v428 = vor.u32 %v425, %v426
        %v429 = vsel %vm294, %v421, %v428
        %v430 = vrot.slane %v425, 4
        %vm455 = vcmask 1043456
        %vm456 = vsmask.f32 7938
        %vm457 = vmand %vm455, %vm456
        %v458 = vld [vmem:[#allocation2] sm:$0xf]
        %v459 = vsel %vm457, %v301, %v458
        %460 = vst [vmem:[#allocation2] sm:$0xf] %v459
        %461 = vst [vmem:[#allocation2 + $0x4] sm:$0xf] %v310
        %vm462 = vcmask 1040384
        %vm463 = vmand %vm462, %vm292
        %v464 = vld [vmem:[#allocation2 + $0x8] sm:$0x1]
        %v465 = vsel %vm463, %v311, %v464
        %466 = vst [vmem:[#allocation2 + $0x8] sm:$0x1] %v465
        %v467 = vld [vmem:[#allocation2 + $0xc] sm:$0xf]
        %v468 = vsel %vm457, %v318, %v467
        %469 = vst [vmem:[#allocation2 + $0xc] sm:$0xf] %v468
        %470 = vst [vmem:[#allocation2 + $0x10] sm:$0xf] %v327
        %v471 = vld [vmem:[#allocation2 + $0x14] sm:$0x1]
        %v472 = vsel %vm463, %v328, %v471
        %473 = vst [vmem:[#allocation2 + $0x14] sm:$0x1] %v472
        %v474 = vld [vmem:[#allocation2 + $0x18] sm:$0xf]
        %v475 = vsel %vm457, %v335, %v474
        %476 = vst [vmem:[#allocation2 + $0x18] sm:$0xf] %v475
        %477 = vst [vmem:[#allocation2 + $0x1c] sm:$0xf] %v344
        %v478 = vld [vmem:[#allocation2 + $0x20] sm:$0x1]
        %v479 = vsel %vm463, %v345, %v478
        %480 = vst [vmem:[#allocation2 + $0x20] sm:$0x1] %v479
        %v481 = vld [vmem:[#allocation2 + $0x24] sm:$0xf]
        %v482 = vsel %vm457, %v352, %v481
        %483 = vst [vmem:[#allocation2 + $0x24] sm:$0xf] %v482
        %484 = vst [vmem:[#allocation2 + $0x28] sm:$0xf] %v361
        %v485 = vld [vmem:[#allocation2 + $0x2c] sm:$0x1]
        %v486 = vsel %vm463, %v362, %v485
        %487 = vst [vmem:[#allocation2 + $0x2c] sm:$0x1] %v486
        %v488 = vld [vmem:[#allocation2 + $0x30] sm:$0xf]
        %v489 = vsel %vm457, %v369, %v488
        %490 = vst [vmem:[#allocation2 + $0x30] sm:$0xf] %v489
        %491 = vst [vmem:[#allocation2 + $0x34] sm:$0xf] %v378
        %v492 = vld [vmem:[#allocation2 + $0x38] sm:$0x1]
        %v493 = vsel %vm463, %v379, %v492
        %494 = vst [vmem:[#allocation2 + $0x38] sm:$0x1] %v493
        %v495 = vld [vmem:[#allocation2 + $0x3c] sm:$0xf]
        %v496 = vsel %vm457, %v386, %v495
        %497 = vst [vmem:[#allocation2 + $0x3c] sm:$0xf] %v496
        %498 = vst [vmem:[#allocation2 + $0x40] sm:$0xf] %v395
        %v499 = vld [vmem:[#allocation2 + $0x44] sm:$0x1]
        %v500 = vsel %vm463, %v396, %v499
        %501 = vst [vmem:[#allocation2 + $0x44] sm:$0x1] %v500
        %v502 = vld [vmem:[#allocation2 + $0x48] sm:$0xf]
        %v503 = vsel %vm457, %v403, %v502
        %504 = vst [vmem:[#allocation2 + $0x48] sm:$0xf] %v503
        %505 = vst [vmem:[#allocation2 + $0x4c] sm:$0xf] %v412
        %v506 = vld [vmem:[#allocation2 + $0x50] sm:$0x1]
        %v507 = vsel %vm463, %v413, %v506
        %508 = vst [vmem:[#allocation2 + $0x50] sm:$0x1] %v507
        %v509 = vld [vmem:[#allocation2 + $0x54] sm:$0xf]
        %v510 = vsel %vm457, %v420, %v509
        %511 = vst [vmem:[#allocation2 + $0x54] sm:$0xf] %v510
        %512 = vst [vmem:[#allocation2 + $0x58] sm:$0xf] %v429
        %v513 = vld [vmem:[#allocation2 + $0x5c] sm:$0x1]
        %v514 = vsel %vm463, %v430, %v513
        %515 = vst [vmem:[#allocation2 + $0x5c] sm:$0x1] %v514
        %v516 = vld [vmem:[#allocation2] sm:$0x1]
        %v517 = vsel %vm463, 0, %v516
        %518 = vst [vmem:[#allocation2] sm:$0x1] %v517
        %v519 = vld [vmem:[#allocation2 + $0xc] sm:$0x1]
        %v520 = vsel %vm463, 0, %v519
        %521 = vst [vmem:[#allocation2 + $0xc] sm:$0x1] %v520
        %v522 = vld [vmem:[#allocation2 + $0x18] sm:$0x1]
        %v523 = vsel %vm463, 0, %v522
        %524 = vst [vmem:[#allocation2 + $0x18] sm:$0x1] %v523
        %v525 = vld [vmem:[#allocation2 + $0x24] sm:$0x1]
        %v526 = vsel %vm463, 0, %v525
        %527 = vst [vmem:[#allocation2 + $0x24] sm:$0x1] %v526
        %v528 = vld [vmem:[#allocation2 + $0x30] sm:$0x1]
        %v529 = vsel %vm463, 0, %v528
        %530 = vst [vmem:[#allocation2 + $0x30] sm:$0x1] %v529
        %v531 = vld [vmem:[#allocation2 + $0x3c] sm:$0x1]
        %v532 = vsel %vm463, 0, %v531
        %533 = vst [vmem:[#allocation2 + $0x3c] sm:$0x1] %v532
        %v534 = vld [vmem:[#allocation2 + $0x48] sm:$0x1]
        %v535 = vsel %vm463, 0, %v534
        %536 = vst [vmem:[#allocation2 + $0x48] sm:$0x1] %v535
        %v537 = vld [vmem:[#allocation2 + $0x54] sm:$0x1]
        %v538 = vsel %vm463, 0, %v537
        %539 = vst [vmem:[#allocation2 + $0x54] sm:$0x1] %v538
        %vm540 = vmand %vm462, %vm456
        %v541 = vld [vmem:[#allocation2 + $0x8] sm:$0x1]
        %v542 = vsel %vm540, 0, %v541
        %543 = vst [vmem:[#allocation2 + $0x8] sm:$0x1] %v542
        %v544 = vld [vmem:[#allocation2 + $0x14] sm:$0x1]
        %v545 = vsel %vm540, 0, %v544
        %546 = vst [vmem:[#allocation2 + $0x14] sm:$0x1] %v545
        %v547 = vld [vmem:[#allocation2 + $0x20] sm:$0x1]
        %v548 = vsel %vm540, 0, %v547
        %549 = vst [vmem:[#allocation2 + $0x20] sm:$0x1] %v548
        %v550 = vld [vmem:[#allocation2 + $0x2c] sm:$0x1]
        %v551 = vsel %vm540, 0, %v550
        %552 = vst [vmem:[#allocation2 + $0x2c] sm:$0x1] %v551
        %v553 = vld [vmem:[#allocation2 + $0x38] sm:$0x1]
        %v554 = vsel %vm540, 0, %v553
        %555 = vst [vmem:[#allocation2 + $0x38] sm:$0x1] %v554
        %v556 = vld [vmem:[#allocation2 + $0x44] sm:$0x1]
        %v557 = vsel %vm540, 0, %v556
        %558 = vst [vmem:[#allocation2 + $0x44] sm:$0x1] %v557
        %v559 = vld [vmem:[#allocation2 + $0x50] sm:$0x1]
        %v560 = vsel %vm540, 0, %v559
        %561 = vst [vmem:[#allocation2 + $0x50] sm:$0x1] %v560
        %v562 = vld [vmem:[#allocation2 + $0x5c] sm:$0x1]
        %v563 = vsel %vm540, 0, %v562
        %564 = vst [vmem:[#allocation2 + $0x5c] sm:$0x1] %v563
        %v565 = vld [vmem:[#allocation2] sm:$0xf]
        %v566 = vld [vmem:[#allocation2 + $0x4] sm:$0xf]
        %v567 = vld [vmem:[#allocation2 + $0xc] sm:$0xf]
        %v568 = vld [vmem:[#allocation2 + $0x10] sm:$0xf]
        %v569 = vld [vmem:[#allocation2 + $0x18] sm:$0xf]
        %v570 = vld [vmem:[#allocation2 + $0x1c] sm:$0xf]
        %v571 = vld [vmem:[#allocation2 + $0x24] sm:$0xf]
        %v572 = vld [vmem:[#allocation2 + $0x28] sm:$0xf]
        %v573 = vld [vmem:[#allocation2 + $0x30] sm:$0xf]
        %v574 = vld [vmem:[#allocation2 + $0x34] sm:$0xf]
        %v575 = vld [vmem:[#allocation2 + $0x3c] sm:$0xf]
        %v576 = vld [vmem:[#allocation2 + $0x40] sm:$0xf]
        %v577 = vld [vmem:[#allocation2 + $0x48] sm:$0xf]
        %v578 = vld [vmem:[#allocation2 + $0x4c] sm:$0xf]
        %v579 = vld [vmem:[#allocation2 + $0x54] sm:$0xf]
        %v580 = vld [vmem:[#allocation2 + $0x58] sm:$0xf]
        %v581 = vld [vmem:[#allocation7] sm:$0xf]
        %v582 = vld [vmem:[#allocation7 + $0x4] sm:$0xf]
        %v583 = vld [vmem:[#allocation7 + $0x8] sm:$0xf]
        %v584 = vld [vmem:[#allocation7 + $0xc] sm:$0xf]
        %v585 = vld [vmem:[#allocation7 + $0x10] sm:$0xf]
        %v586 = vld [vmem:[#allocation7 + $0x14] sm:$0xf]
        %v587 = vld [vmem:[#allocation7 + $0x18] sm:$0xf]
        %v588 = vld [vmem:[#allocation7 + $0x1c] sm:$0xf]
        %v589 = vld [vmem:[#allocation7 + $0x20] sm:$0xf]
        %v590 = vld [vmem:[#allocation7 + $0x24] sm:$0xf]
        %v591 = vld [vmem:[#allocation7 + $0x28] sm:$0xf]
        %v592 = vld [vmem:[#allocation7 + $0x2c] sm:$0xf]
        %v593 = vld [vmem:[#allocation7 + $0x30] sm:$0xf]
        %v594 = vld [vmem:[#allocation7 + $0x34] sm:$0xf]
        %v595 = vld [vmem:[#allocation7 + $0x38] sm:$0xf]
        %v596 = vld [vmem:[#allocation7 + $0x3c] sm:$0xf]
        %v597 = vld [vmem:[#allocation2 + $0x8] sm:$0x1]
        %v598 = vld [vmem:[#allocation2 + $0x14] sm:$0x1]
        %v599 = vld [vmem:[#allocation2 + $0x20] sm:$0x1]
        %v600 = vld [vmem:[#allocation2 + $0x2c] sm:$0x1]
        %v601 = vld [vmem:[#allocation2 + $0x38] sm:$0x1]
        %v602 = vld [vmem:[#allocation2 + $0x44] sm:$0x1]
        %v603 = vld [vmem:[#allocation2 + $0x50] sm:$0x1]
        %v604 = vld [vmem:[#allocation2 + $0x5c] sm:$0x1]
        %vm605 = vsmask.f32 3328
        %vm606 = vsmask.f32 7440
        %vm607 = vmor %vm605, %vm606
        %v609 = vshrl.u32 %v565, 16
        %v611 = vrot.slane %v609, 4
        %v612 = vshll.u32 %v565, 16
        %v614 = vrot.slane %v612, 5
        %v615 = vor.u32 %v611, %v614
        %v616 = vrot.slane %v615, 4
        %v618 = vshll.u32 %v566, 16
        %v620 = vrot.slane %v618, 5
        %v621 = vsel %vm607, %v616, %v620
        %v622 = vshrl.u32 %v566, 16
        %v624 = vrot.slane %v622, 4
        %v625 = vor.u32 %v624, %v620
        %v626 = vrot.slane %v625, 4
        %v628 = vshll.u32 %v597, 16
        %v630 = vrot.slane %v628, 5
        %v631 = vsel %vm607, %v626, %v630
        %v633 = vshrl.u32 %v567, 16
        %v635 = vrot.slane %v633, 4
        %v636 = vshll.u32 %v567, 16
        %v638 = vrot.slane %v636, 5
        %v639 = vor.u32 %v635, %v638
        %v640 = vrot.slane %v639, 4
        %v642 = vshll.u32 %v568, 16
        %v644 = vrot.slane %v642, 5
        %v645 = vsel %vm607, %v640, %v644
        %v646 = vshrl.u32 %v568, 16
        %v648 = vrot.slane %v646, 4
        %v649 = vor.u32 %v648, %v644
        %v650 = vrot.slane %v649, 4
        %v652 = vshll.u32 %v598, 16
        %v654 = vrot.slane %v652, 5
        %v655 = vsel %vm607, %v650, %v654
        %v657 = vshrl.u32 %v569, 16
        %v659 = vrot.slane %v657, 4
        %v660 = vshll.u32 %v569, 16
        %v662 = vrot.slane %v660, 5
        %v663 = vor.u32 %v659, %v662
        %v664 = vrot.slane %v663, 4
        %v666 = vshll.u32 %v570, 16
        %v668 = vrot.slane %v666, 5
        %v669 = vsel %vm607, %v664, %v668
        %v670 = vshrl.u32 %v570, 16
        %v672 = vrot.slane %v670, 4
        %v673 = vor.u32 %v672, %v668
        %v674 = vrot.slane %v673, 4
        %v676 = vshll.u32 %v599, 16
        %v678 = vrot.slane %v676, 5
        %v679 = vsel %vm607, %v674, %v678
        %v681 = vshrl.u32 %v571, 16
        %v683 = vrot.slane %v681, 4
        %v684 = vshll.u32 %v571, 16
        %v686 = vrot.slane %v684, 5
        %v687 = vor.u32 %v683, %v686
        %v688 = vrot.slane %v687, 4
        %v690 = vshll.u32 %v572, 16
        %v692 = vrot.slane %v690, 5
        %v693 = vsel %vm607, %v688, %v692
        %v694 = vshrl.u32 %v572, 16
        %v696 = vrot.slane %v694, 4
        %v697 = vor.u32 %v696, %v692
        %v698 = vrot.slane %v697, 4
        %v700 = vshll.u32 %v600, 16
        %v702 = vrot.slane %v700, 5
        %v703 = vsel %vm607, %v698, %v702
        %v705 = vshrl.u32 %v573, 16
        %v707 = vrot.slane %v705, 4
        %v708 = vshll.u32 %v573, 16
        %v710 = vrot.slane %v708, 5
        %v711 = vor.u32 %v707, %v710
        %v712 = vrot.slane %v711, 4
        %v714 = vshll.u32 %v574, 16
        %v716 = vrot.slane %v714, 5
        %v717 = vsel %vm607, %v712, %v716
        %v718 = vshrl.u32 %v574, 16
        %v720 = vrot.slane %v718, 4
        %v721 = vor.u32 %v720, %v716
        %v722 = vrot.slane %v721, 4
        %v724 = vshll.u32 %v601, 16
        %v726 = vrot.slane %v724, 5
        %v727 = vsel %vm607, %v722, %v726
        %v729 = vshrl.u32 %v575, 16
        %v731 = vrot.slane %v729, 4
        %v732 = vshll.u32 %v575, 16
        %v734 = vrot.slane %v732, 5
        %v735 = vor.u32 %v731, %v734
        %v736 = vrot.slane %v735, 4
        %v738 = vshll.u32 %v576, 16
        %v740 = vrot.slane %v738, 5
        %v741 = vsel %vm607, %v736, %v740
        %v742 = vshrl.u32 %v576, 16
        %v744 = vrot.slane %v742, 4
        %v745 = vor.u32 %v744, %v740
        %v746 = vrot.slane %v745, 4
        %v748 = vshll.u32 %v602, 16
        %v750 = vrot.slane %v748, 5
        %v751 = vsel %vm607, %v746, %v750
        %v753 = vshrl.u32 %v577, 16
        %v755 = vrot.slane %v753, 4
        %v756 = vshll.u32 %v577, 16
        %v758 = vrot.slane %v756, 5
        %v759 = vor.u32 %v755, %v758
        %v760 = vrot.slane %v759, 4
        %v762 = vshll.u32 %v578, 16
        %v764 = vrot.slane %v762, 5
        %v765 = vsel %vm607, %v760, %v764
        %v766 = vshrl.u32 %v578, 16
        %v768 = vrot.slane %v766, 4
        %v769 = vor.u32 %v768, %v764
        %v770 = vrot.slane %v769, 4
        %v772 = vshll.u32 %v603, 16
        %v774 = vrot.slane %v772, 5
        %v775 = vsel %vm607, %v770, %v774
        %v777 = vshrl.u32 %v579, 16
        %v779 = vrot.slane %v777, 4
        %v780 = vshll.u32 %v579, 16
        %v782 = vrot.slane %v780, 5
        %v783 = vor.u32 %v779, %v782
        %v784 = vrot.slane %v783, 4
        %v786 = vshll.u32 %v580, 16
        %v788 = vrot.slane %v786, 5
        %v789 = vsel %vm607, %v784, %v788
        %v790 = vshrl.u32 %v580, 16
        %v792 = vrot.slane %v790, 4
        %v793 = vor.u32 %v792, %v788
        %v794 = vrot.slane %v793, 4
        %v796 = vshll.u32 %v604, 16
        %v798 = vrot.slane %v796, 5
        %v799 = vsel %vm607, %v794, %v798
        %s800 = scalar_lea.vmem [#allocation7], 64
        %v801 = vld [vmem:[%s800] sm:$0xf]
        %v802 = vld [vmem:[%s800 + $0x4] sm:$0xf]
        %v803 = vld [vmem:[%s800 + $0x8] sm:$0xf]
        %v804 = vld [vmem:[%s800 + $0xc] sm:$0xf]
        %v805 = vld [vmem:[%s800 + $0x10] sm:$0xf]
        %v806 = vld [vmem:[%s800 + $0x14] sm:$0xf]
        %v807 = vld [vmem:[%s800 + $0x18] sm:$0xf]
        %v808 = vld [vmem:[%s800 + $0x1c] sm:$0xf]
        %v809 = vld [vmem:[%s800 + $0x20] sm:$0xf]
        %v810 = vld [vmem:[%s800 + $0x24] sm:$0xf]
        %v811 = vld [vmem:[%s800 + $0x28] sm:$0xf]
        %v812 = vld [vmem:[%s800 + $0x2c] sm:$0xf]
        %v813 = vld [vmem:[%s800 + $0x30] sm:$0xf]
        %v814 = vld [vmem:[%s800 + $0x34] sm:$0xf]
        %v815 = vld [vmem:[%s800 + $0x38] sm:$0xf]
        %v816 = vld [vmem:[%s800 + $0x3c] sm:$0xf]
        %v817 = vunpack.c.l.b16 %v621
        %v818 = vunpack.c.l.b16 %v631
        %v819 = vunpack.c.l.b16 %v645
        %v820 = vunpack.c.l.b16 %v655
        %v821 = vunpack.c.l.b16 %v669
        %v822 = vunpack.c.l.b16 %v679
        %v823 = vunpack.c.l.b16 %v693
        %v824 = vunpack.c.l.b16 %v703
        %v825 = vunpack.c.l.b16 %v717
        %v826 = vunpack.c.l.b16 %v727
        %v827 = vunpack.c.l.b16 %v741
        %v828 = vunpack.c.l.b16 %v751
        %v829 = vunpack.c.l.b16 %v765
        %v830 = vunpack.c.l.b16 %v775
        %v831 = vunpack.c.l.b16 %v789
        %v832 = vunpack.c.l.b16 %v799
        %v833 = vpack.c.b16 %v818, %v817
        %v834 = vpack.c.b16 %v820, %v819
        %v835 = vpack.c.b16 %v822, %v821
        %v836 = vpack.c.b16 %v824, %v823
        %v837 = vpack.c.b16 %v826, %v825
        %v838 = vpack.c.b16 %v828, %v827
        %v839 = vpack.c.b16 %v830, %v829
        %v840 = vpack.c.b16 %v832, %v831
        %v865 = vunpack.c.l.b16 %v801
        %v866 = vunpack.c.l.b16 %v802
        %v867 = vunpack.c.l.b16 %v803
        %v868 = vunpack.c.l.b16 %v804
        %v869 = vunpack.c.l.b16 %v805
        %v870 = vunpack.c.l.b16 %v806
        %v871 = vunpack.c.l.b16 %v807
        %v872 = vunpack.c.l.b16 %v808
        %v873 = vunpack.c.l.b16 %v809
        %v874 = vunpack.c.l.b16 %v810
        %v875 = vunpack.c.l.b16 %v811
        %v876 = vunpack.c.l.b16 %v812
        %v877 = vunpack.c.l.b16 %v813
        %v878 = vunpack.c.l.b16 %v814
        %v879 = vunpack.c.l.b16 %v815
        %v880 = vunpack.c.l.b16 %v816
        %v881 = vpack.c.b16 %v866, %v865
        %v882 = vpack.c.b16 %v868, %v867
        %v883 = vpack.c.b16 %v870, %v869
        %v884 = vpack.c.b16 %v872, %v871
        %v885 = vpack.c.b16 %v874, %v873
        %v886 = vpack.c.b16 %v876, %v875
        %v887 = vpack.c.b16 %v878, %v877
        %v888 = vpack.c.b16 %v880, %v879
        %897 = vmatprep.subr.bf16.mxu0 0
        %898 = vmatpush1.bf16.msra.mxu0 %v881
        %899 = vmatprep.subr.bf16.mxu0 0
        %900 = vmatpush1.bf16.msra.mxu0 %v882
        %901 = vmatprep.subr.bf16.mxu0 0
        %902 = vmatpush1.bf16.msra.mxu0 %v883
        %903 = vmatprep.subr.bf16.mxu0 0
        %904 = vmatpush1.bf16.msra.mxu0 %v884
        %905 = vmatprep.subr.bf16.mxu0 0
        %906 = vmatpush1.bf16.msra.mxu0 %v885
        %907 = vmatprep.subr.bf16.mxu0 0
        %908 = vmatpush1.bf16.msra.mxu0 %v886
        %909 = vmatprep.subr.bf16.mxu0 0
        %910 = vmatpush1.bf16.msra.mxu0 %v887
        %911 = vmatprep.subr.bf16.mxu0 0
        %912 = vmatpush1.bf16.msra.mxu0 %v888
        %913 = vmatprep.subr.bf16.mxu0 0
        %914 = vmatpush1.bf16.msra.mxu0 0
        %915 = vmatprep.subr.bf16.mxu0 0
        %916 = vmatpush1.bf16.msra.mxu0 0
        %917 = vmatprep.subr.bf16.mxu0 0
        %918 = vmatpush1.bf16.msra.mxu0 0
        %919 = vmatprep.subr.bf16.mxu0 0
        %920 = vmatpush1.bf16.msra.mxu0 0
        %921 = vmatprep.subr.bf16.mxu0 0
        %922 = vmatpush1.bf16.msra.mxu0 0
        %923 = vmatprep.subr.bf16.mxu0 0
        %924 = vmatpush1.bf16.msra.mxu0 0
        %925 = vmatprep.subr.bf16.mxu0 0
        %926 = vmatpush1.bf16.msra.mxu0 0
        %927 = vmatprep.subr.bf16.mxu0 0
        %928 = vmatpush1.bf16.msra.mxu0 0
        %929 = vmatprep.mubr.bf16.mxu0 0
        %930 = vmatmul.mubr.bf16.gmra.mrb[0].mxu0 %v833
        %v931 = vpop.f32.mrb[0].mxu0
        %v932 = vadd.f32 0.0, %v931
        %v933 = vpop.f32.mrb[0].mxu0
        %v934 = vpop.f32.mrb[0].mxu0
        %v935 = vadd.f32 0.0, %v934
        %v936 = vpop.f32.mrb[0].mxu0
        %937 = vmatprep.mubr.bf16.mxu0 0
        %938 = vmatmul.mubr.bf16.gmra.mrb[0].mxu0 %v834
        %v939 = vpop.f32.mrb[0].mxu0
        %v940 = vadd.f32 0.0, %v939
        %v941 = vpop.f32.mrb[0].mxu0
        %v942 = vpop.f32.mrb[0].mxu0
        %v943 = vadd.f32 0.0, %v942
        %v944 = vpop.f32.mrb[0].mxu0
        %945 = vmatprep.mubr.bf16.mxu0 0
        %946 = vmatmul.mubr.bf16.gmra.mrb[0].mxu0 %v835
        %v947 = vpop.f32.mrb[0].mxu0
        %v948 = vadd.f32 0.0, %v947
        %v949 = vpop.f32.mrb[0].mxu0
        %v950 = vpop.f32.mrb[0].mxu0
        %v951 = vadd.f32 0.0, %v950
        %v952 = vpop.f32.mrb[0].mxu0
        %953 = vmatprep.mubr.bf16.mxu0 0
        %954 = vmatmul.mubr.bf16.gmra.mrb[0].mxu0 %v836
        %v955 = vpop.f32.mrb[0].mxu0
        %v956 = vadd.f32 0.0, %v955
        %v957 = vpop.f32.mrb[0].mxu0
        %v958 = vpop.f32.mrb[0].mxu0
        %v959 = vadd.f32 0.0, %v958
        %v960 = vpop.f32.mrb[0].mxu0
        %961 = vmatprep.mubr.bf16.mxu0 0
        %962 = vmatmul.mubr.bf16.gmra.mrb[0].mxu0 %v837
        %v963 = vpop.f32.mrb[0].mxu0
        %v964 = vadd.f32 0.0, %v963
        %v965 = vpop.f32.mrb[0].mxu0
        %v966 = vpop.f32.mrb[0].mxu0
        %v967 = vadd.f32 0.0, %v966
        %v968 = vpop.f32.mrb[0].mxu0
        %969 = vmatprep.mubr.bf16.mxu0 0
        %970 = vmatmul.mubr.bf16.gmra.mrb[0].mxu0 %v838
        %v971 = vpop.f32.mrb[0].mxu0
        %v972 = vadd.f32 0.0, %v971
        %v973 = vpop.f32.mrb[0].mxu0
        %v974 = vpop.f32.mrb[0].mxu0
        %v975 = vadd.f32 0.0, %v974
        %v976 = vpop.f32.mrb[0].mxu0
        %977 = vmatprep.mubr.bf16.mxu0 0
        %978 = vmatmul.mubr.bf16.gmra.mrb[0].mxu0 %v839
        %v979 = vpop.f32.mrb[0].mxu0
        %v980 = vadd.f32 0.0, %v979
        %v981 = vpop.f32.mrb[0].mxu0
        %v982 = vpop.f32.mrb[0].mxu0
        %v983 = vadd.f32 0.0, %v982
        %v984 = vpop.f32.mrb[0].mxu0
        %985 = vmatprep.mubr.bf16.mxu0 0
        %986 = vmatmul.mubr.bf16.gmra.mrb[0].mxu0 %v840
        %v987 = vpop.f32.mrb[0].mxu0
        %v988 = vadd.f32 0.0, %v987
        %v989 = vpop.f32.mrb[0].mxu0
        %v990 = vpop.f32.mrb[0].mxu0
        %v991 = vadd.f32 0.0, %v990
        %v992 = vpop.f32.mrb[0].mxu0
        %993 = vdwg.mxu0
        %v1010 = vunpack.c.l.b16 %v565
        %v1011 = vunpack.c.l.b16 %v566
        %v1012 = vunpack.c.l.b16 %v567
        %v1013 = vunpack.c.l.b16 %v568
        %v1014 = vunpack.c.l.b16 %v569
        %v1015 = vunpack.c.l.b16 %v570
        %v1016 = vunpack.c.l.b16 %v571
        %v1017 = vunpack.c.l.b16 %v572
        %v1018 = vunpack.c.l.b16 %v573
        %v1019 = vunpack.c.l.b16 %v574
        %v1020 = vunpack.c.l.b16 %v575
        %v1021 = vunpack.c.l.b16 %v576
        %v1022 = vunpack.c.l.b16 %v577
        %v1023 = vunpack.c.l.b16 %v578
        %v1024 = vunpack.c.l.b16 %v579
        %v1025 = vunpack.c.l.b16 %v580
        %v1026 = vpack.c.b16 %v1011, %v1010
        %v1027 = vpack.c.b16 %v1013, %v1012
        %v1028 = vpack.c.b16 %v1015, %v1014
        %v1029 = vpack.c.b16 %v1017, %v1016
        %v1030 = vpack.c.b16 %v1019, %v1018
        %v1031 = vpack.c.b16 %v1021, %v1020
        %v1032 = vpack.c.b16 %v1023, %v1022
        %v1033 = vpack.c.b16 %v1025, %v1024
        %v1058 = vunpack.c.l.b16 %v581
        %v1059 = vunpack.c.l.b16 %v582
        %v1060 = vunpack.c.l.b16 %v583
        %v1061 = vunpack.c.l.b16 %v584
        %v1062 = vunpack.c.l.b16 %v585
        %v1063 = vunpack.c.l.b16 %v586
        %v1064 = vunpack.c.l.b16 %v587
        %v1065 = vunpack.c.l.b16 %v588
        %v1066 = vunpack.c.l.b16 %v589
        %v1067 = vunpack.c.l.b16 %v590
        %v1068 = vunpack.c.l.b16 %v591
        %v1069 = vunpack.c.l.b16 %v592
        %v1070 = vunpack.c.l.b16 %v593
        %v1071 = vunpack.c.l.b16 %v594
        %v1072 = vunpack.c.l.b16 %v595
        %v1073 = vunpack.c.l.b16 %v596
        %v1074 = vpack.c.b16 %v1059, %v1058
        %v1075 = vpack.c.b16 %v1061, %v1060
        %v1076 = vpack.c.b16 %v1063, %v1062
        %v1077 = vpack.c.b16 %v1065, %v1064
        %v1078 = vpack.c.b16 %v1067, %v1066
        %v1079 = vpack.c.b16 %v1069, %v1068
        %v1080 = vpack.c.b16 %v1071, %v1070
        %v1081 = vpack.c.b16 %v1073, %v1072
        %1090 = vmatprep.subr.bf16.mxu0 0
        %1091 = vmatpush1.bf16.msra.mxu0 %v1074
        %1092 = vmatprep.subr.bf16.mxu0 0
        %1093 = vmatpush1.bf16.msra.mxu0 %v1075
        %1094 = vmatprep.subr.bf16.mxu0 0
        %1095 = vmatpush1.bf16.msra.mxu0 %v1076
        %1096 = vmatprep.subr.bf16.mxu0 0
        %1097 = vmatpush1.bf16.msra.mxu0 %v1077
        %1098 = vmatprep.subr.bf16.mxu0 0
        %1099 = vmatpush1.bf16.msra.mxu0 %v1078
        %1100 = vmatprep.subr.bf16.mxu0 0
        %1101 = vmatpush1.bf16.msra.mxu0 %v1079
        %1102 = vmatprep.subr.bf16.mxu0 0
        %1103 = vmatpush1.bf16.msra.mxu0 %v1080
        %1104 = vmatprep.subr.bf16.mxu0 0
        %1105 = vmatpush1.bf16.msra.mxu0 %v1081
        %1106 = vmatprep.subr.bf16.mxu0 0
        %1107 = vmatpush1.bf16.msra.mxu0 0
        %1108 = vmatprep.subr.bf16.mxu0 0
        %1109 = vmatpush1.bf16.msra.mxu0 0
        %1110 = vmatprep.subr.bf16.mxu0 0
        %1111 = vmatpush1.bf16.msra.mxu0 0
        %1112 = vmatprep.subr.bf16.mxu0 0
        %1113 = vmatpush1.bf16.msra.mxu0 0
        %1114 = vmatprep.subr.bf16.mxu0 0
        %1115 = vmatpush1.bf16.msra.mxu0 0
        %1116 = vmatprep.subr.bf16.mxu0 0
        %1117 = vmatpush1.bf16.msra.mxu0 0
        %1118 = vmatprep.subr.bf16.mxu0 0
        %1119 = vmatpush1.bf16.msra.mxu0 0
        %1120 = vmatprep.subr.bf16.mxu0 0
        %1121 = vmatpush1.bf16.msra.mxu0 0
        %1122 = vmatprep.mubr.bf16.mxu0 0
        %1123 = vmatmul.mubr.bf16.gmra.mrb[0].mxu0 %v1026
        %v1124 = vpop.f32.mrb[0].mxu0
        %v1125 = vadd.f32 %v932, %v1124
        %v1126 = vpop.f32.mrb[0].mxu0
        %v1127 = vpop.f32.mrb[0].mxu0
        %v1128 = vadd.f32 %v935, %v1127
        %v1129 = vpop.f32.mrb[0].mxu0
        %1130 = vmatprep.mubr.bf16.mxu0 0
        %1131 = vmatmul.mubr.bf16.gmra.mrb[0].mxu0 %v1027
        %v1132 = vpop.f32.mrb[0].mxu0
        %v1133 = vadd.f32 %v940, %v1132
        %v1134 = vpop.f32.mrb[0].mxu0
        %v1135 = vpop.f32.mrb[0].mxu0
        %v1136 = vadd.f32 %v943, %v1135
        %v1137 = vpop.f32.mrb[0].mxu0
        %1138 = vmatprep.mubr.bf16.mxu0 0
        %1139 = vmatmul.mubr.bf16.gmra.mrb[0].mxu0 %v1028
        %v1140 = vpop.f32.mrb[0].mxu0
        %v1141 = vadd.f32 %v948, %v1140
        %v1142 = vpop.f32.mrb[0].mxu0
        %v1143 = vpop.f32.mrb[0].mxu0
        %v1144 = vadd.f32 %v951, %v1143
        %v1145 = vpop.f32.mrb[0].mxu0
        %1146 = vmatprep.mubr.bf16.mxu0 0
        %1147 = vmatmul.mubr.bf16.gmra.mrb[0].mxu0 %v1029
        %v1148 = vpop.f32.mrb[0].mxu0
        %v1149 = vadd.f32 %v956, %v1148
        %v1150 = vpop.f32.mrb[0].mxu0
        %v1151 = vpop.f32.mrb[0].mxu0
        %v1152 = vadd.f32 %v959, %v1151
        %v1153 = vpop.f32.mrb[0].mxu0
        %1154 = vmatprep.mubr.bf16.mxu0 0
        %1155 = vmatmul.mubr.bf16.gmra.mrb[0].mxu0 %v1030
        %v1156 = vpop.f32.mrb[0].mxu0
        %v1157 = vadd.f32 %v964, %v1156
        %v1158 = vpop.f32.mrb[0].mxu0
        %v1159 = vpop.f32.mrb[0].mxu0
        %v1160 = vadd.f32 %v967, %v1159
        %v1161 = vpop.f32.mrb[0].mxu0
        %1162 = vmatprep.mubr.bf16.mxu0 0
        %1163 = vmatmul.mubr.bf16.gmra.mrb[0].mxu0 %v1031
        %v1164 = vpop.f32.mrb[0].mxu0
        %v1165 = vadd.f32 %v972, %v1164
        %v1166 = vpop.f32.mrb[0].mxu0
        %v1167 = vpop.f32.mrb[0].mxu0
        %v1168 = vadd.f32 %v975, %v1167
        %v1169 = vpop.f32.mrb[0].mxu0
        %1170 = vmatprep.mubr.bf16.mxu0 0
        %1171 = vmatmul.mubr.bf16.gmra.mrb[0].mxu0 %v1032
        %v1172 = vpop.f32.mrb[0].mxu0
        %v1173 = vadd.f32 %v980, %v1172
        %v1174 = vpop.f32.mrb[0].mxu0
        %v1175 = vpop.f32.mrb[0].mxu0
        %v1176 = vadd.f32 %v983, %v1175
        %v1177 = vpop.f32.mrb[0].mxu0
        %1178 = vmatprep.mubr.bf16.mxu0 0
        %1179 = vmatmul.mubr.bf16.gmra.mrb[0].mxu0 %v1033
        %v1180 = vpop.f32.mrb[0].mxu0
        %v1181 = vadd.f32 %v988, %v1180
        %v1182 = vpop.f32.mrb[0].mxu0
        %v1183 = vpop.f32.mrb[0].mxu0
        %v1184 = vadd.f32 %v991, %v1183
        %v1185 = vpop.f32.mrb[0].mxu0
        %1186 = vdwg.mxu0
        %v1187 = vld [vmem:[#allocation2] sm:$0xe]
        %v1188 = vld [vmem:[#allocation2 + $0xc] sm:$0xe]
        %v1189 = vld [vmem:[#allocation2 + $0x18] sm:$0xe]
        %v1190 = vld [vmem:[#allocation2 + $0x24] sm:$0xe]
        %v1191 = vld [vmem:[#allocation2 + $0x30] sm:$0xe]
        %v1192 = vld [vmem:[#allocation2 + $0x3c] sm:$0xe]
        %v1193 = vld [vmem:[#allocation2 + $0x48] sm:$0xe]
        %v1194 = vld [vmem:[#allocation2 + $0x54] sm:$0xe]
        %vm1211 = vcmask 1042432
        %vm1212 = vcmask 1046532
        %vm1213 = vmor %vm1211, %vm1212
        %v1214 = vrot.slane %v1187, 5
        %v1215 = vrot.slane %v1214, 4
        %v1216 = vrot.slane %v566, 5
        %v1217 = vsel %vm1213, %v1215, %v1216
        %v1218 = vrot.slane %v1216, 4
        %v1219 = vrot.slane %v597, 5
        %v1220 = vsel %vm1213, %v1218, %v1219
        %v1221 = vrot.slane %v1188, 5
        %v1222 = vrot.slane %v1221, 4
        %v1223 = vrot.slane %v568, 5
        %v1224 = vsel %vm1213, %v1222, %v1223
        %v1225 = vrot.slane %v1223, 4
        %v1226 = vrot.slane %v598, 5
        %v1227 = vsel %vm1213, %v1225, %v1226
        %v1228 = vrot.slane %v1189, 5
        %v1229 = vrot.slane %v1228, 4
        %v1230 = vrot.slane %v570, 5
        %v1231 = vsel %vm1213, %v1229, %v1230
        %v1232 = vrot.slane %v1230, 4
        %v1233 = vrot.slane %v599, 5
        %v1234 = vsel %vm1213, %v1232, %v1233
        %v1235 = vrot.slane %v1190, 5
        %v1236 = vrot.slane %v1235, 4
        %v1237 = vrot.slane %v572, 5
        %v1238 = vsel %vm1213, %v1236, %v1237
        %v1239 = vrot.slane %v1237, 4
        %v1240 = vrot.slane %v600, 5
        %v1241 = vsel %vm1213, %v1239, %v1240
        %v1242 = vrot.slane %v1191, 5
        %v1243 = vrot.slane %v1242, 4
        %v1244 = vrot.slane %v574, 5
        %v1245 = vsel %vm1213, %v1243, %v1244
        %v1246 = vrot.slane %v1244, 4
        %v1247 = vrot.slane %v601, 5
        %v1248 = vsel %vm1213, %v1246, %v1247
        %v1249 = vrot.slane %v1192, 5
        %v1250 = vrot.slane %v1249, 4
        %v1251 = vrot.slane %v576, 5
        %v1252 = vsel %vm1213, %v1250, %v1251
        %v1253 = vrot.slane %v1251, 4
        %v1254 = vrot.slane %v602, 5
        %v1255 = vsel %vm1213, %v1253, %v1254
        %v1256 = vrot.slane %v1193, 5
        %v1257 = vrot.slane %v1256, 4
        %v1258 = vrot.slane %v578, 5
        %v1259 = vsel %vm1213, %v1257, %v1258
        %v1260 = vrot.slane %v1258, 4
        %v1261 = vrot.slane %v603, 5
        %v1262 = vsel %vm1213, %v1260, %v1261
        %v1263 = vrot.slane %v1194, 5
        %v1264 = vrot.slane %v1263, 4
        %v1265 = vrot.slane %v580, 5
        %v1266 = vsel %vm1213, %v1264, %v1265
        %v1267 = vrot.slane %v1265, 4
        %v1268 = vrot.slane %v604, 5
        %v1269 = vsel %vm1213, %v1267, %v1268
        %s1270 = scalar_lea.vmem [#allocation7], 128
        %v1271 = vld [vmem:[%s1270] sm:$0xf]
        %v1272 = vld [vmem:[%s1270 + $0x4] sm:$0xf]
        %v1273 = vld [vmem:[%s1270 + $0x8] sm:$0xf]
        %v1274 = vld [vmem:[%s1270 + $0xc] sm:$0xf]
        %v1275 = vld [vmem:[%s1270 + $0x10] sm:$0xf]
        %v1276 = vld [vmem:[%s1270 + $0x14] sm:$0xf]
        %v1277 = vld [vmem:[%s1270 + $0x18] sm:$0xf]
        %v1278 = vld [vmem:[%s1270 + $0x1c] sm:$0xf]
        %v1279 = vld [vmem:[%s1270 + $0x20] sm:$0xf]
        %v1280 = vld [vmem:[%s1270 + $0x24] sm:$0xf]
        %v1281 = vld [vmem:[%s1270 + $0x28] sm:$0xf]
        %v1282 = vld [vmem:[%s1270 + $0x2c] sm:$0xf]
        %v1283 = vld [vmem:[%s1270 + $0x30] sm:$0xf]
        %v1284 = vld [vmem:[%s1270 + $0x34] sm:$0xf]
        %v1285 = vld [vmem:[%s1270 + $0x38] sm:$0xf]
        %v1286 = vld [vmem:[%s1270 + $0x3c] sm:$0xf]
        %v1287 = vunpack.c.l.b16 %v1217
        %v1288 = vunpack.c.l.b16 %v1220
        %v1289 = vunpack.c.l.b16 %v1224
        %v1290 = vunpack.c.l.b16 %v1227
        %v1291 = vunpack.c.l.b16 %v1231
        %v1292 = vunpack.c.l.b16 %v1234
        %v1293 = vunpack.c.l.b16 %v1238
        %v1294 = vunpack.c.l.b16 %v1241
        %v1295 = vunpack.c.l.b16 %v1245
        %v1296 = vunpack.c.l.b16 %v1248
        %v1297 = vunpack.c.l.b16 %v1252
        %v1298 = vunpack.c.l.b16 %v1255
        %v1299 = vunpack.c.l.b16 %v1259
        %v1300 = vunpack.c.l.b16 %v1262
        %v1301 = vunpack.c.l.b16 %v1266
        %v1302 = vunpack.c.l.b16 %v1269
        %v1303 = vpack.c.b16 %v1288, %v1287
        %v1304 = vpack.c.b16 %v1290, %v1289
        %v1305 = vpack.c.b16 %v1292, %v1291
        %v1306 = vpack.c.b16 %v1294, %v1293
        %v1307 = vpack.c.b16 %v1296, %v1295
        %v1308 = vpack.c.b16 %v1298, %v1297
        %v1309 = vpack.c.b16 %v1300, %v1299
        %v1310 = vpack.c.b16 %v1302, %v1301
        %v1335 = vunpack.c.l.b16 %v1271
        %v1336 = vunpack.c.l.b16 %v1272
        %v1337 = vunpack.c.l.b16 %v1273
        %v1338 = vunpack.c.l.b16 %v1274
        %v1339 = vunpack.c.l.b16 %v1275
        %v1340 = vunpack.c.l.b16 %v1276
        %v1341 = vunpack.c.l.b16 %v1277
        %v1342 = vunpack.c.l.b16 %v1278
        %v1343 = vunpack.c.l.b16 %v1279
        %v1344 = vunpack.c.l.b16 %v1280
        %v1345 = vunpack.c.l.b16 %v1281
        %v1346 = vunpack.c.l.b16 %v1282
        %v1347 = vunpack.c.l.b16 %v1283
        %v1348 = vunpack.c.l.b16 %v1284
        %v1349 = vunpack.c.l.b16 %v1285
        %v1350 = vunpack.c.l.b16 %v1286
        %v1351 = vpack.c.b16 %v1336, %v1335
        %v1352 = vpack.c.b16 %v1338, %v1337
        %v1353 = vpack.c.b16 %v1340, %v1339
        %v1354 = vpack.c.b16 %v1342, %v1341
        %v1355 = vpack.c.b16 %v1344, %v1343
        %v1356 = vpack.c.b16 %v1346, %v1345
        %v1357 = vpack.c.b16 %v1348, %v1347
        %v1358 = vpack.c.b16 %v1350, %v1349
        %1367 = vmatprep.subr.bf16.mxu0 0
        %1368 = vmatpush1.bf16.msra.mxu0 %v1351
        %1369 = vmatprep.subr.bf16.mxu0 0
        %1370 = vmatpush1.bf16.msra.mxu0 %v1352
        %1371 = vmatprep.subr.bf16.mxu0 0
        %1372 = vmatpush1.bf16.msra.mxu0 %v1353
        %1373 = vmatprep.subr.bf16.mxu0 0
        %1374 = vmatpush1.bf16.msra.mxu0 %v1354
        %1375 = vmatprep.subr.bf16.mxu0 0
        %1376 = vmatpush1.bf16.msra.mxu0 %v1355
        %1377 = vmatprep.subr.bf16.mxu0 0
        %1378 = vmatpush1.bf16.msra.mxu0 %v1356
        %1379 = vmatprep.subr.bf16.mxu0 0
        %1380 = vmatpush1.bf16.msra.mxu0 %v1357
        %1381 = vmatprep.subr.bf16.mxu0 0
        %1382 = vmatpush1.bf16.msra.mxu0 %v1358
        %1383 = vmatprep.subr.bf16.mxu0 0
        %1384 = vmatpush1.bf16.msra.mxu0 0
        %1385 = vmatprep.subr.bf16.mxu0 0
        %1386 = vmatpush1.bf16.msra.mxu0 0
        %1387 = vmatprep.subr.bf16.mxu0 0
        %1388 = vmatpush1.bf16.msra.mxu0 0
        %1389 = vmatprep.subr.bf16.mxu0 0
        %1390 = vmatpush1.bf16.msra.mxu0 0
        %1391 = vmatprep.subr.bf16.mxu0 0
        %1392 = vmatpush1.bf16.msra.mxu0 0
        %1393 = vmatprep.subr.bf16.mxu0 0
        %1394 = vmatpush1.bf16.msra.mxu0 0
        %1395 = vmatprep.subr.bf16.mxu0 0
        %1396 = vmatpush1.bf16.msra.mxu0 0
        %1397 = vmatprep.subr.bf16.mxu0 0
        %1398 = vmatpush1.bf16.msra.mxu0 0
        %1399 = vmatprep.mubr.bf16.mxu0 0
        %1400 = vmatmul.mubr.bf16.gmra.mrb[0].mxu0 %v1303
        %v1401 = vpop.f32.mrb[0].mxu0
        %v1402 = vadd.f32 0.0, %v1401
        %v1403 = vpop.f32.mrb[0].mxu0
        %v1404 = vpop.f32.mrb[0].mxu0
        %v1405 = vadd.f32 0.0, %v1404
        %v1406 = vpop.f32.mrb[0].mxu0
        %1407 = vmatprep.mubr.bf16.mxu0 0
        %1408 = vmatmul.mubr.bf16.gmra.mrb[0].mxu0 %v1304
        %v1409 = vpop.f32.mrb[0].mxu0
        %v1410 = vadd.f32 0.0, %v1409
        %v1411 = vpop.f32.mrb[0].mxu0
        %v1412 = vpop.f32.mrb[0].mxu0
        %v1413 = vadd.f32 0.0, %v1412
        %v1414 = vpop.f32.mrb[0].mxu0
        %1415 = vmatprep.mubr.bf16.mxu0 0
        %1416 = vmatmul.mubr.bf16.gmra.mrb[0].mxu0 %v1305
        %v1417 = vpop.f32.mrb[0].mxu0
        %v1418 = vadd.f32 0.0, %v1417
        %v1419 = vpop.f32.mrb[0].mxu0
        %v1420 = vpop.f32.mrb[0].mxu0
        %v1421 = vadd.f32 0.0, %v1420
        %v1422 = vpop.f32.mrb[0].mxu0
        %1423 = vmatprep.mubr.bf16.mxu0 0
        %1424 = vmatmul.mubr.bf16.gmra.mrb[0].mxu0 %v1306
        %v1425 = vpop.f32.mrb[0].mxu0
        %v1426 = vadd.f32 0.0, %v1425
        %v1427 = vpop.f32.mrb[0].mxu0
        %v1428 = vpop.f32.mrb[0].mxu0
        %v1429 = vadd.f32 0.0, %v1428
        %v1430 = vpop.f32.mrb[0].mxu0
        %1431 = vmatprep.mubr.bf16.mxu0 0
        %1432 = vmatmul.mubr.bf16.gmra.mrb[0].mxu0 %v1307
        %v1433 = vpop.f32.mrb[0].mxu0
        %v1434 = vadd.f32 0.0, %v1433
        %v1435 = vpop.f32.mrb[0].mxu0
        %v1436 = vpop.f32.mrb[0].mxu0
        %v1437 = vadd.f32 0.0, %v1436
        %v1438 = vpop.f32.mrb[0].mxu0
        %1439 = vmatprep.mubr.bf16.mxu0 0
        %1440 = vmatmul.mubr.bf16.gmra.mrb[0].mxu0 %v1308
        %v1441 = vpop.f32.mrb[0].mxu0
        %v1442 = vadd.f32 0.0, %v1441
        %v1443 = vpop.f32.mrb[0].mxu0
        %v1444 = vpop.f32.mrb[0].mxu0
        %v1445 = vadd.f32 0.0, %v1444
        %v1446 = vpop.f32.mrb[0].mxu0
        %1447 = vmatprep.mubr.bf16.mxu0 0
        %1448 = vmatmul.mubr.bf16.gmra.mrb[0].mxu0 %v1309
        %v1449 = vpop.f32.mrb[0].mxu0
        %v1450 = vadd.f32 0.0, %v1449
        %v1451 = vpop.f32.mrb[0].mxu0
        %v1452 = vpop.f32.mrb[0].mxu0
        %v1453 = vadd.f32 0.0, %v1452
        %v1454 = vpop.f32.mrb[0].mxu0
        %1455 = vmatprep.mubr.bf16.mxu0 0
        %1456 = vmatmul.mubr.bf16.gmra.mrb[0].mxu0 %v1310
        %v1457 = vpop.f32.mrb[0].mxu0
        %v1458 = vadd.f32 0.0, %v1457
        %v1459 = vpop.f32.mrb[0].mxu0
        %v1460 = vpop.f32.mrb[0].mxu0
        %v1461 = vadd.f32 0.0, %v1460
        %v1462 = vpop.f32.mrb[0].mxu0
        %1463 = vdwg.mxu0
        %v1464 = vadd.f32 %v1125, %v1402
        %v1465 = vadd.f32 %v1128, %v1405
        %v1466 = vadd.f32 %v1133, %v1410
        %v1467 = vadd.f32 %v1136, %v1413
        %v1468 = vadd.f32 %v1141, %v1418
        %v1469 = vadd.f32 %v1144, %v1421
        %v1470 = vadd.f32 %v1149, %v1426
        %v1471 = vadd.f32 %v1152, %v1429
        %v1472 = vadd.f32 %v1157, %v1434
        %v1473 = vadd.f32 %v1160, %v1437
        %v1474 = vadd.f32 %v1165, %v1442
        %v1475 = vadd.f32 %v1168, %v1445
        %v1476 = vadd.f32 %v1173, %v1450
        %v1477 = vadd.f32 %v1176, %v1453
        %v1478 = vadd.f32 %v1181, %v1458
        %v1479 = vadd.f32 %v1184, %v1461
        %v1480 = vld [vmem:[%s3] sm:$0x1]
        %v1482 = vlaneseq
        %v1483 = vshrl.u32 %v1482, 7
        %v1484 = vsub.s32 0, %v1483
        %v1485 = vrot.slane %v1480, %v1484
        %v1487 = vadd.f32 %v1464, %v1485
        %v1488 = vadd.f32 %v1465, %v1485
        %v1489 = vadd.f32 %v1466, %v1485
        %v1490 = vadd.f32 %v1467, %v1485
        %v1491 = vadd.f32 %v1468, %v1485
        %v1492 = vadd.f32 %v1469, %v1485
        %v1493 = vadd.f32 %v1470, %v1485
        %v1494 = vadd.f32 %v1471, %v1485
        %v1495 = vadd.f32 %v1472, %v1485
        %v1496 = vadd.f32 %v1473, %v1485
        %v1497 = vadd.f32 %v1474, %v1485
        %v1498 = vadd.f32 %v1475, %v1485
        %v1499 = vadd.f32 %v1476, %v1485
        %v1500 = vadd.f32 %v1477, %v1485
        %v1501 = vadd.f32 %v1478, %v1485
        %v1502 = vadd.f32 %v1479, %v1485
        %v1503 = vmax.f32 %v1487, 0.0
        %v1504 = vmax.f32 %v1488, 0.0
        %v1505 = vmax.f32 %v1489, 0.0
        %v1506 = vmax.f32 %v1490, 0.0
        %v1507 = vmax.f32 %v1491, 0.0
        %v1508 = vmax.f32 %v1492, 0.0
        %v1509 = vmax.f32 %v1493, 0.0
        %v1510 = vmax.f32 %v1494, 0.0
        %v1511 = vmax.f32 %v1495, 0.0
        %v1512 = vmax.f32 %v1496, 0.0
        %v1513 = vmax.f32 %v1497, 0.0
        %v1514 = vmax.f32 %v1498, 0.0
        %v1515 = vmax.f32 %v1499, 0.0
        %v1516 = vmax.f32 %v1500, 0.0
        %v1517 = vmax.f32 %v1501, 0.0
        %v1518 = vmax.f32 %v1502, 0.0
        %v1519 = vpack.c.bf16 %v1504, %v1503
        %v1520 = vpack.c.bf16 %v1506, %v1505
        %v1521 = vpack.c.bf16 %v1508, %v1507
        %v1522 = vpack.c.bf16 %v1510, %v1509
        %v1523 = vpack.c.bf16 %v1512, %v1511
        %v1524 = vpack.c.bf16 %v1514, %v1513
        %v1525 = vpack.c.bf16 %v1516, %v1515
        %v1526 = vpack.c.bf16 %v1518, %v1517
        %v1535 = vunpack.c.l.b16 %v1519
        %v1536 = vunpack.c.h.b16 %v1519
        %v1537 = vunpack.c.l.b16 %v1520
        %v1538 = vunpack.c.h.b16 %v1520
        %v1539 = vunpack.c.l.b16 %v1521
        %v1540 = vunpack.c.h.b16 %v1521
        %v1541 = vunpack.c.l.b16 %v1522
        %v1542 = vunpack.c.h.b16 %v1522
        %v1543 = vunpack.c.l.b16 %v1523
        %v1544 = vunpack.c.h.b16 %v1523
        %v1545 = vunpack.c.l.b16 %v1524
        %v1546 = vunpack.c.h.b16 %v1524
        %v1547 = vunpack.c.l.b16 %v1525
        %v1548 = vunpack.c.h.b16 %v1525
        %v1549 = vunpack.c.l.b16 %v1526
        %v1550 = vunpack.c.h.b16 %v1526
        %v1551 = vpack.c.b16 %v1535, %v1535
        %v1552 = vpack.c.b16 %v1536, %v1536
        %v1553 = vpack.c.b16 %v1537, %v1537
        %v1554 = vpack.c.b16 %v1538, %v1538
        %v1555 = vpack.c.b16 %v1539, %v1539
        %v1556 = vpack.c.b16 %v1540, %v1540
        %v1557 = vpack.c.b16 %v1541, %v1541
        %v1558 = vpack.c.b16 %v1542, %v1542
        %v1559 = vpack.c.b16 %v1543, %v1543
        %v1560 = vpack.c.b16 %v1544, %v1544
        %v1561 = vpack.c.b16 %v1545, %v1545
        %v1562 = vpack.c.b16 %v1546, %v1546
        %v1563 = vpack.c.b16 %v1547, %v1547
        %v1564 = vpack.c.b16 %v1548, %v1548
        %v1565 = vpack.c.b16 %v1549, %v1549
        %v1566 = vpack.c.b16 %v1550, %v1550
        %v1568 = vshrl.u32 %v1551, 16
        %v1570 = vrot.slane %v1568, 7
        %v1571 = vshll.u32 %v1551, 16
        %v1573 = vor.u32 %v1570, %v1571
        %v1574 = vrot.slane %v1570, 4
        %v1576 = vshrl.u32 %v1552, 16
        %v1578 = vrot.slane %v1576, 7
        %v1579 = vshll.u32 %v1552, 16
        %v1581 = vor.u32 %v1578, %v1579
        %v1582 = vsel %vm294, %v1574, %v1581
        %v1583 = vrot.slane %v1578, 4
        %v1585 = vshrl.u32 %v1553, 16
        %v1587 = vrot.slane %v1585, 7
        %v1588 = vshll.u32 %v1553, 16
        %v1590 = vor.u32 %v1587, %v1588
        %v1591 = vrot.slane %v1587, 4
        %v1593 = vshrl.u32 %v1554, 16
        %v1595 = vrot.slane %v1593, 7
        %v1596 = vshll.u32 %v1554, 16
        %v1598 = vor.u32 %v1595, %v1596
        %v1599 = vsel %vm294, %v1591, %v1598
        %v1600 = vrot.slane %v1595, 4
        %v1602 = vshrl.u32 %v1555, 16
        %v1604 = vrot.slane %v1602, 7
        %v1605 = vshll.u32 %v1555, 16
        %v1607 = vor.u32 %v1604, %v1605
        %v1608 = vrot.slane %v1604, 4
        %v1610 = vshrl.u32 %v1556, 16
        %v1612 = vrot.slane %v1610, 7
        %v1613 = vshll.u32 %v1556, 16
        %v1615 = vor.u32 %v1612, %v1613
        %v1616 = vsel %vm294, %v1608, %v1615
        %v1617 = vrot.slane %v1612, 4
        %v1619 = vshrl.u32 %v1557, 16
        %v1621 = vrot.slane %v1619, 7
        %v1622 = vshll.u32 %v1557, 16
        %v1624 = vor.u32 %v1621, %v1622
        %v1625 = vrot.slane %v1621, 4
        %v1627 = vshrl.u32 %v1558, 16
        %v1629 = vrot.slane %v1627, 7
        %v1630 = vshll.u32 %v1558, 16
        %v1632 = vor.u32 %v1629, %v1630
        %v1633 = vsel %vm294, %v1625, %v1632
        %v1634 = vrot.slane %v1629, 4
        %v1636 = vshrl.u32 %v1559, 16
        %v1638 = vrot.slane %v1636, 7
        %v1639 = vshll.u32 %v1559, 16
        %v1641 = vor.u32 %v1638, %v1639
        %v1642 = vrot.slane %v1638, 4
        %v1644 = vshrl.u32 %v1560, 16
        %v1646 = vrot.slane %v1644, 7
        %v1647 = vshll.u32 %v1560, 16
        %v1649 = vor.u32 %v1646, %v1647
        %v1650 = vsel %vm294, %v1642, %v1649
        %v1651 = vrot.slane %v1646, 4
        %v1653 = vshrl.u32 %v1561, 16
        %v1655 = vrot.slane %v1653, 7
        %v1656 = vshll.u32 %v1561, 16
        %v1658 = vor.u32 %v1655, %v1656
        %v1659 = vrot.slane %v1655, 4
        %v1661 = vshrl.u32 %v1562, 16
        %v1663 = vrot.slane %v1661, 7
        %v1664 = vshll.u32 %v1562, 16
        %v1666 = vor.u32 %v1663, %v1664
        %v1667 = vsel %vm294, %v1659, %v1666
        %v1668 = vrot.slane %v1663, 4
        %v1670 = vshrl.u32 %v1563, 16
        %v1672 = vrot.slane %v1670, 7
        %v1673 = vshll.u32 %v1563, 16
        %v1675 = vor.u32 %v1672, %v1673
        %v1676 = vrot.slane %v1672, 4
        %v1678 = vshrl.u32 %v1564, 16
        %v1680 = vrot.slane %v1678, 7
        %v1681 = vshll.u32 %v1564, 16
        %v1683 = vor.u32 %v1680, %v1681
        %v1684 = vsel %vm294, %v1676, %v1683
        %v1685 = vrot.slane %v1680, 4
        %v1687 = vshrl.u32 %v1565, 16
        %v1689 = vrot.slane %v1687, 7
        %v1690 = vshll.u32 %v1565, 16
        %v1692 = vor.u32 %v1689, %v1690
        %v1693 = vrot.slane %v1689, 4
        %v1695 = vshrl.u32 %v1566, 16
        %v1697 = vrot.slane %v1695, 7
        %v1698 = vshll.u32 %v1566, 16
        %v1700 = vor.u32 %v1697, %v1698
        %v1701 = vsel %vm294, %v1693, %v1700
        %v1702 = vrot.slane %v1697, 4
        %v1727 = vld [vmem:[#allocation3] sm:$0xf]
        %v1728 = vsel %vm457, %v1573, %v1727
        %1729 = vst [vmem:[#allocation3] sm:$0xf] %v1728
        %1730 = vst [vmem:[#allocation3 + $0x4] sm:$0xf] %v1582
        %v1731 = vld [vmem:[#allocation3 + $0x8] sm:$0x1]
        %v1732 = vsel %vm463, %v1583, %v1731
        %1733 = vst [vmem:[#allocation3 + $0x8] sm:$0x1] %v1732
        %v1734 = vld [vmem:[#allocation3 + $0xc] sm:$0xf]
        %v1735 = vsel %vm457, %v1590, %v1734
        %1736 = vst [vmem:[#allocation3 + $0xc] sm:$0xf] %v1735
        %1737 = vst [vmem:[#allocation3 + $0x10] sm:$0xf] %v1599
        %v1738 = vld [vmem:[#allocation3 + $0x14] sm:$0x1]
        %v1739 = vsel %vm463, %v1600, %v1738
        %1740 = vst [vmem:[#allocation3 + $0x14] sm:$0x1] %v1739
        %v1741 = vld [vmem:[#allocation3 + $0x18] sm:$0xf]
        %v1742 = vsel %vm457, %v1607, %v1741
        %1743 = vst [vmem:[#allocation3 + $0x18] sm:$0xf] %v1742
        %1744 = vst [vmem:[#allocation3 + $0x1c] sm:$0xf] %v1616
        %v1745 = vld [vmem:[#allocation3 + $0x20] sm:$0x1]
        %v1746 = vsel %vm463, %v1617, %v1745
        %1747 = vst [vmem:[#allocation3 + $0x20] sm:$0x1] %v1746
        %v1748 = vld [vmem:[#allocation3 + $0x24] sm:$0xf]
        %v1749 = vsel %vm457, %v1624, %v1748
        %1750 = vst [vmem:[#allocation3 + $0x24] sm:$0xf] %v1749
        %1751 = vst [vmem:[#allocation3 + $0x28] sm:$0xf] %v1633
        %v1752 = vld [vmem:[#allocation3 + $0x2c] sm:$0x1]
        %v1753 = vsel %vm463, %v1634, %v1752
        %1754 = vst [vmem:[#allocation3 + $0x2c] sm:$0x1] %v1753
        %v1755 = vld [vmem:[#allocation3 + $0x30] sm:$0xf]
        %v1756 = vsel %vm457, %v1641, %v1755
        %1757 = vst [vmem:[#allocation3 + $0x30] sm:$0xf] %v1756
        %1758 = vst [vmem:[#allocation3 + $0x34] sm:$0xf] %v1650
        %v1759 = vld [vmem:[#allocation3 + $0x38] sm:$0x1]
        %v1760 = vsel %vm463, %v1651, %v1759
        %1761 = vst [vmem:[#allocation3 + $0x38] sm:$0x1] %v1760
        %v1762 = vld [vmem:[#allocation3 + $0x3c] sm:$0xf]
        %v1763 = vsel %vm457, %v1658, %v1762
        %1764 = vst [vmem:[#allocation3 + $0x3c] sm:$0xf] %v1763
        %1765 = vst [vmem:[#allocation3 + $0x40] sm:$0xf] %v1667
        %v1766 = vld [vmem:[#allocation3 + $0x44] sm:$0x1]
        %v1767 = vsel %vm463, %v1668, %v1766
        %1768 = vst [vmem:[#allocation3 + $0x44] sm:$0x1] %v1767
        %v1769 = vld [vmem:[#allocation3 + $0x48] sm:$0xf]
        %v1770 = vsel %vm457, %v1675, %v1769
        %1771 = vst [vmem:[#allocation3 + $0x48] sm:$0xf] %v1770
        %1772 = vst [vmem:[#allocation3 + $0x4c] sm:$0xf] %v1684
        %v1773 = vld [vmem:[#allocation3 + $0x50] sm:$0x1]
        %v1774 = vsel %vm463, %v1685, %v1773
        %1775 = vst [vmem:[#allocation3 + $0x50] sm:$0x1] %v1774
        %v1776 = vld [vmem:[#allocation3 + $0x54] sm:$0xf]
        %v1777 = vsel %vm457, %v1692, %v1776
        %1778 = vst [vmem:[#allocation3 + $0x54] sm:$0xf] %v1777
        %1779 = vst [vmem:[#allocation3 + $0x58] sm:$0xf] %v1701
        %v1780 = vld [vmem:[#allocation3 + $0x5c] sm:$0x1]
        %v1781 = vsel %vm463, %v1702, %v1780
        %1782 = vst [vmem:[#allocation3 + $0x5c] sm:$0x1] %v1781
        %v1783 = vld [vmem:[#allocation3] sm:$0x1]
        %v1784 = vsel %vm463, 0, %v1783
        %1785 = vst [vmem:[#allocation3] sm:$0x1] %v1784
        %v1786 = vld [vmem:[#allocation3 + $0xc] sm:$0x1]
        %v1787 = vsel %vm463, 0, %v1786
        %1788 = vst [vmem:[#allocation3 + $0xc] sm:$0x1] %v1787
        %v1789 = vld [vmem:[#allocation3 + $0x18] sm:$0x1]
        %v1790 = vsel %vm463, 0, %v1789
        %1791 = vst [vmem:[#allocation3 + $0x18] sm:$0x1] %v1790
        %v1792 = vld [vmem:[#allocation3 + $0x24] sm:$0x1]
        %v1793 = vsel %vm463, 0, %v1792
        %1794 = vst [vmem:[#allocation3 + $0x24] sm:$0x1] %v1793
        %v1795 = vld [vmem:[#allocation3 + $0x30] sm:$0x1]
        %v1796 = vsel %vm463, 0, %v1795
        %1797 = vst [vmem:[#allocation3 + $0x30] sm:$0x1] %v1796
        %v1798 = vld [vmem:[#allocation3 + $0x3c] sm:$0x1]
        %v1799 = vsel %vm463, 0, %v1798
        %1800 = vst [vmem:[#allocation3 + $0x3c] sm:$0x1] %v1799
        %v1801 = vld [vmem:[#allocation3 + $0x48] sm:$0x1]
        %v1802 = vsel %vm463, 0, %v1801
        %1803 = vst [vmem:[#allocation3 + $0x48] sm:$0x1] %v1802
        %v1804 = vld [vmem:[#allocation3 + $0x54] sm:$0x1]
        %v1805 = vsel %vm463, 0, %v1804
        %1806 = vst [vmem:[#allocation3 + $0x54] sm:$0x1] %v1805
        %v1807 = vld [vmem:[#allocation3 + $0x8] sm:$0x1]
        %v1808 = vsel %vm540, 0, %v1807
        %1809 = vst [vmem:[#allocation3 + $0x8] sm:$0x1] %v1808
        %v1810 = vld [vmem:[#allocation3 + $0x14] sm:$0x1]
        %v1811 = vsel %vm540, 0, %v1810
        %1812 = vst [vmem:[#allocation3 + $0x14] sm:$0x1] %v1811
        %v1813 = vld [vmem:[#allocation3 + $0x20] sm:$0x1]
        %v1814 = vsel %vm540, 0, %v1813
        %1815 = vst [vmem:[#allocation3 + $0x20] sm:$0x1] %v1814
        %v1816 = vld [vmem:[#allocation3 + $0x2c] sm:$0x1]
        %v1817 = vsel %vm540, 0, %v1816
        %1818 = vst [vmem:[#allocation3 + $0x2c] sm:$0x1] %v1817
        %v1819 = vld [vmem:[#allocation3 + $0x38] sm:$0x1]
        %v1820 = vsel %vm540, 0, %v1819
        %1821 = vst [vmem:[#allocation3 + $0x38] sm:$0x1] %v1820
        %v1822 = vld [vmem:[#allocation3 + $0x44] sm:$0x1]
        %v1823 = vsel %vm540, 0, %v1822
        %1824 = vst [vmem:[#allocation3 + $0x44] sm:$0x1] %v1823
        %v1825 = vld [vmem:[#allocation3 + $0x50] sm:$0x1]
        %v1826 = vsel %vm540, 0, %v1825
        %1827 = vst [vmem:[#allocation3 + $0x50] sm:$0x1] %v1826
        %v1828 = vld [vmem:[#allocation3 + $0x5c] sm:$0x1]
        %v1829 = vsel %vm540, 0, %v1828
        %1830 = vst [vmem:[#allocation3 + $0x5c] sm:$0x1] %v1829
        %v1831 = vld [vmem:[#allocation3] sm:$0xf]
        %v1832 = vld [vmem:[#allocation3 + $0x4] sm:$0xf]
        %v1833 = vld [vmem:[#allocation3 + $0xc] sm:$0xf]
        %v1834 = vld [vmem:[#allocation3 + $0x10] sm:$0xf]
        %v1835 = vld [vmem:[#allocation3 + $0x18] sm:$0xf]
        %v1836 = vld [vmem:[#allocation3 + $0x1c] sm:$0xf]
        %v1837 = vld [vmem:[#allocation3 + $0x24] sm:$0xf]
        %v1838 = vld [vmem:[#allocation3 + $0x28] sm:$0xf]
        %v1839 = vld [vmem:[#allocation3 + $0x30] sm:$0xf]
        %v1840 = vld [vmem:[#allocation3 + $0x34] sm:$0xf]
        %v1841 = vld [vmem:[#allocation3 + $0x3c] sm:$0xf]
        %v1842 = vld [vmem:[#allocation3 + $0x40] sm:$0xf]
        %v1843 = vld [vmem:[#allocation3 + $0x48] sm:$0xf]
        %v1844 = vld [vmem:[#allocation3 + $0x4c] sm:$0xf]
        %v1845 = vld [vmem:[#allocation3 + $0x54] sm:$0xf]
        %v1846 = vld [vmem:[#allocation3 + $0x58] sm:$0xf]
        %v1847 = vld [vmem:[#allocation9] sm:$0xf]
        %v1848 = vld [vmem:[#allocation9 + $0x4] sm:$0xf]
        %v1849 = vld [vmem:[#allocation9 + $0x8] sm:$0xf]
        %v1850 = vld [vmem:[#allocation9 + $0xc] sm:$0xf]
        %v1851 = vld [vmem:[#allocation9 + $0x10] sm:$0xf]
        %v1852 = vld [vmem:[#allocation9 + $0x14] sm:$0xf]
        %v1853 = vld [vmem:[#allocation9 + $0x18] sm:$0xf]
        %v1854 = vld [vmem:[#allocation9 + $0x1c] sm:$0xf]
        %v1855 = vld [vmem:[#allocation9 + $0x20] sm:$0xf]
        %v1856 = vld [vmem:[#allocation9 + $0x24] sm:$0xf]
        %v1857 = vld [vmem:[#allocation9 + $0x28] sm:$0xf]
        %v1858 = vld [vmem:[#allocation9 + $0x2c] sm:$0xf]
        %v1859 = vld [vmem:[#allocation9 + $0x30] sm:$0xf]
        %v1860 = vld [vmem:[#allocation9 + $0x34] sm:$0xf]
        %v1861 = vld [vmem:[#allocation9 + $0x38] sm:$0xf]
        %v1862 = vld [vmem:[#allocation9 + $0x3c] sm:$0xf]
        %v1863 = vld [vmem:[#allocation3 + $0x8] sm:$0x1]
        %v1864 = vld [vmem:[#allocation3 + $0x14] sm:$0x1]
        %v1865 = vld [vmem:[#allocation3 + $0x20] sm:$0x1]
        %v1866 = vld [vmem:[#allocation3 + $0x2c] sm:$0x1]
        %v1867 = vld [vmem:[#allocation3 + $0x38] sm:$0x1]
        %v1868 = vld [vmem:[#allocation3 + $0x44] sm:$0x1]
        %v1869 = vld [vmem:[#allocation3 + $0x50] sm:$0x1]
        %v1870 = vld [vmem:[#allocation3 + $0x5c] sm:$0x1]
        %v1872 = vshrl.u32 %v1831, 16
        %v1874 = vrot.slane %v1872, 4
        %v1875 = vshll.u32 %v1831, 16
        %v1877 = vrot.slane %v1875, 5
        %v1878 = vor.u32 %v1874, %v1877
        %v1879 = vrot.slane %v1878, 4
        %v1881 = vshll.u32 %v1832, 16
        %v1883 = vrot.slane %v1881, 5
        %v1884 = vsel %vm607, %v1879, %v1883
        %v1885 = vshrl.u32 %v1832, 16
        %v1887 = vrot.slane %v1885, 4
        %v1888 = vor.u32 %v1887, %v1883
        %v1889 = vrot.slane %v1888, 4
        %v1891 = vshll.u32 %v1863, 16
        %v1893 = vrot.slane %v1891, 5
        %v1894 = vsel %vm607, %v1889, %v1893
        %v1896 = vshrl.u32 %v1833, 16
        %v1898 = vrot.slane %v1896, 4
        %v1899 = vshll.u32 %v1833, 16
        %v1901 = vrot.slane %v1899, 5
        %v1902 = vor.u32 %v1898, %v1901
        %v1903 = vrot.slane %v1902, 4
        %v1905 = vshll.u32 %v1834, 16
        %v1907 = vrot.slane %v1905, 5
        %v1908 = vsel %vm607, %v1903, %v1907
        %v1909 = vshrl.u32 %v1834, 16
        %v1911 = vrot.slane %v1909, 4
        %v1912 = vor.u32 %v1911, %v1907
        %v1913 = vrot.slane %v1912, 4
        %v1915 = vshll.u32 %v1864, 16
        %v1917 = vrot.slane %v1915, 5
        %v1918 = vsel %vm607, %v1913, %v1917
        %v1920 = vshrl.u32 %v1835, 16
        %v1922 = vrot.slane %v1920, 4
        %v1923 = vshll.u32 %v1835, 16
        %v1925 = vrot.slane %v1923, 5
        %v1926 = vor.u32 %v1922, %v1925
        %v1927 = vrot.slane %v1926, 4
        %v1929 = vshll.u32 %v1836, 16
        %v1931 = vrot.slane %v1929, 5
        %v1932 = vsel %vm607, %v1927, %v1931
        %v1933 = vshrl.u32 %v1836, 16
        %v1935 = vrot.slane %v1933, 4
        %v1936 = vor.u32 %v1935, %v1931
        %v1937 = vrot.slane %v1936, 4
        %v1939 = vshll.u32 %v1865, 16
        %v1941 = vrot.slane %v1939, 5
        %v1942 = vsel %vm607, %v1937, %v1941
        %v1944 = vshrl.u32 %v1837, 16
        %v1946 = vrot.slane %v1944, 4
        %v1947 = vshll.u32 %v1837, 16
        %v1949 = vrot.slane %v1947, 5
        %v1950 = vor.u32 %v1946, %v1949
        %v1951 = vrot.slane %v1950, 4
        %v1953 = vshll.u32 %v1838, 16
        %v1955 = vrot.slane %v1953, 5
        %v1956 = vsel %vm607, %v1951, %v1955
        %v1957 = vshrl.u32 %v1838, 16
        %v1959 = vrot.slane %v1957, 4
        %v1960 = vor.u32 %v1959, %v1955
        %v1961 = vrot.slane %v1960, 4
        %v1963 = vshll.u32 %v1866, 16
        %v1965 = vrot.slane %v1963, 5
        %v1966 = vsel %vm607, %v1961, %v1965
        %v1968 = vshrl.u32 %v1839, 16
        %v1970 = vrot.slane %v1968, 4
        %v1971 = vshll.u32 %v1839, 16
        %v1973 = vrot.slane %v1971, 5
        %v1974 = vor.u32 %v1970, %v1973
        %v1975 = vrot.slane %v1974, 4
        %v1977 = vshll.u32 %v1840, 16
        %v1979 = vrot.slane %v1977, 5
        %v1980 = vsel %vm607, %v1975, %v1979
        %v1981 = vshrl.u32 %v1840, 16
        %v1983 = vrot.slane %v1981, 4
        %v1984 = vor.u32 %v1983, %v1979
        %v1985 = vrot.slane %v1984, 4
        %v1987 = vshll.u32 %v1867, 16
        %v1989 = vrot.slane %v1987, 5
        %v1990 = vsel %vm607, %v1985, %v1989
        %v1992 = vshrl.u32 %v1841, 16
        %v1994 = vrot.slane %v1992, 4
        %v1995 = vshll.u32 %v1841, 16
        %v1997 = vrot.slane %v1995, 5
        %v1998 = vor.u32 %v1994, %v1997
        %v1999 = vrot.slane %v1998, 4
        %v2001 = vshll.u32 %v1842, 16
        %v2003 = vrot.slane %v2001, 5
        %v2004 = vsel %vm607, %v1999, %v2003
        %v2005 = vshrl.u32 %v1842, 16
        %v2007 = vrot.slane %v2005, 4
        %v2008 = vor.u32 %v2007, %v2003
        %v2009 = vrot.slane %v2008, 4
        %v2011 = vshll.u32 %v1868, 16
        %v2013 = vrot.slane %v2011, 5
        %v2014 = vsel %vm607, %v2009, %v2013
        %v2016 = vshrl.u32 %v1843, 16
        %v2018 = vrot.slane %v2016, 4
        %v2019 = vshll.u32 %v1843, 16
        %v2021 = vrot.slane %v2019, 5
        %v2022 = vor.u32 %v2018, %v2021
        %v2023 = vrot.slane %v2022, 4
        %v2025 = vshll.u32 %v1844, 16
        %v2027 = vrot.slane %v2025, 5
        %v2028 = vsel %vm607, %v2023, %v2027
        %v2029 = vshrl.u32 %v1844, 16
        %v2031 = vrot.slane %v2029, 4
        %v2032 = vor.u32 %v2031, %v2027
        %v2033 = vrot.slane %v2032, 4
        %v2035 = vshll.u32 %v1869, 16
        %v2037 = vrot.slane %v2035, 5
        %v2038 = vsel %vm607, %v2033, %v2037
        %v2040 = vshrl.u32 %v1845, 16
        %v2042 = vrot.slane %v2040, 4
        %v2043 = vshll.u32 %v1845, 16
        %v2045 = vrot.slane %v2043, 5
        %v2046 = vor.u32 %v2042, %v2045
        %v2047 = vrot.slane %v2046, 4
        %v2049 = vshll.u32 %v1846, 16
        %v2051 = vrot.slane %v2049, 5
        %v2052 = vsel %vm607, %v2047, %v2051
        %v2053 = vshrl.u32 %v1846, 16
        %v2055 = vrot.slane %v2053, 4
        %v2056 = vor.u32 %v2055, %v2051
        %v2057 = vrot.slane %v2056, 4
        %v2059 = vshll.u32 %v1870, 16
        %v2061 = vrot.slane %v2059, 5
        %v2062 = vsel %vm607, %v2057, %v2061
        %s2063 = scalar_lea.vmem [#allocation9], 64
        %v2064 = vld [vmem:[%s2063] sm:$0xf]
        %v2065 = vld [vmem:[%s2063 + $0x4] sm:$0xf]
        %v2066 = vld [vmem:[%s2063 + $0x8] sm:$0xf]
        %v2067 = vld [vmem:[%s2063 + $0xc] sm:$0xf]
        %v2068 = vld [vmem:[%s2063 + $0x10] sm:$0xf]
        %v2069 = vld [vmem:[%s2063 + $0x14] sm:$0xf]
        %v2070 = vld [vmem:[%s2063 + $0x18] sm:$0xf]
        %v2071 = vld [vmem:[%s2063 + $0x1c] sm:$0xf]
        %v2072 = vld [vmem:[%s2063 + $0x20] sm:$0xf]
        %v2073 = vld [vmem:[%s2063 + $0x24] sm:$0xf]
        %v2074 = vld [vmem:[%s2063 + $0x28] sm:$0xf]
        %v2075 = vld [vmem:[%s2063 + $0x2c] sm:$0xf]
        %v2076 = vld [vmem:[%s2063 + $0x30] sm:$0xf]
        %v2077 = vld [vmem:[%s2063 + $0x34] sm:$0xf]
        %v2078 = vld [vmem:[%s2063 + $0x38] sm:$0xf]
        %v2079 = vld [vmem:[%s2063 + $0x3c] sm:$0xf]
        %v2080 = vunpack.c.l.b16 %v1884
        %v2081 = vunpack.c.l.b16 %v1894
        %v2082 = vunpack.c.l.b16 %v1908
        %v2083 = vunpack.c.l.b16 %v1918
        %v2084 = vunpack.c.l.b16 %v1932
        %v2085 = vunpack.c.l.b16 %v1942
        %v2086 = vunpack.c.l.b16 %v1956
        %v2087 = vunpack.c.l.b16 %v1966
        %v2088 = vunpack.c.l.b16 %v1980
        %v2089 = vunpack.c.l.b16 %v1990
        %v2090 = vunpack.c.l.b16 %v2004
        %v2091 = vunpack.c.l.b16 %v2014
        %v2092 = vunpack.c.l.b16 %v2028
        %v2093 = vunpack.c.l.b16 %v2038
        %v2094 = vunpack.c.l.b16 %v2052
        %v2095 = vunpack.c.l.b16 %v2062
        %v2096 = vpack.c.b16 %v2081, %v2080
        %v2097 = vpack.c.b16 %v2083, %v2082
        %v2098 = vpack.c.b16 %v2085, %v2084
        %v2099 = vpack.c.b16 %v2087, %v2086
        %v2100 = vpack.c.b16 %v2089, %v2088
        %v2101 = vpack.c.b16 %v2091, %v2090
        %v2102 = vpack.c.b16 %v2093, %v2092
        %v2103 = vpack.c.b16 %v2095, %v2094
        %v2128 = vunpack.c.l.b16 %v2064
        %v2129 = vunpack.c.l.b16 %v2065
        %v2130 = vunpack.c.l.b16 %v2066
        %v2131 = vunpack.c.l.b16 %v2067
        %v2132 = vunpack.c.l.b16 %v2068
        %v2133 = vunpack.c.l.b16 %v2069
        %v2134 = vunpack.c.l.b16 %v2070
        %v2135 = vunpack.c.l.b16 %v2071
        %v2136 = vunpack.c.l.b16 %v2072
        %v2137 = vunpack.c.l.b16 %v2073
        %v2138 = vunpack.c.l.b16 %v2074
        %v2139 = vunpack.c.l.b16 %v2075
        %v2140 = vunpack.c.l.b16 %v2076
        %v2141 = vunpack.c.l.b16 %v2077
        %v2142 = vunpack.c.l.b16 %v2078
        %v2143 = vunpack.c.l.b16 %v2079
        %v2144 = vpack.c.b16 %v2129, %v2128
        %v2145 = vpack.c.b16 %v2131, %v2130
        %v2146 = vpack.c.b16 %v2133, %v2132
        %v2147 = vpack.c.b16 %v2135, %v2134
        %v2148 = vpack.c.b16 %v2137, %v2136
        %v2149 = vpack.c.b16 %v2139, %v2138
        %v2150 = vpack.c.b16 %v2141, %v2140
        %v2151 = vpack.c.b16 %v2143, %v2142
        %2160 = vmatprep.subr.bf16.mxu0 0
        %2161 = vmatpush1.bf16.msra.mxu0 %v2144
        %2162 = vmatprep.subr.bf16.mxu0 0
        %2163 = vmatpush1.bf16.msra.mxu0 %v2145
        %2164 = vmatprep.subr.bf16.mxu0 0
        %2165 = vmatpush1.bf16.msra.mxu0 %v2146
        %2166 = vmatprep.subr.bf16.mxu0 0
        %2167 = vmatpush1.bf16.msra.mxu0 %v2147
        %2168 = vmatprep.subr.bf16.mxu0 0
        %2169 = vmatpush1.bf16.msra.mxu0 %v2148
        %2170 = vmatprep.subr.bf16.mxu0 0
        %2171 = vmatpush1.bf16.msra.mxu0 %v2149
        %2172 = vmatprep.subr.bf16.mxu0 0
        %2173 = vmatpush1.bf16.msra.mxu0 %v2150
        %2174 = vmatprep.subr.bf16.mxu0 0
        %2175 = vmatpush1.bf16.msra.mxu0 %v2151
        %2176 = vmatprep.subr.bf16.mxu0 0
        %2177 = vmatpush1.bf16.msra.mxu0 0
        %2178 = vmatprep.subr.bf16.mxu0 0
        %2179 = vmatpush1.bf16.msra.mxu0 0
        %2180 = vmatprep.subr.bf16.mxu0 0
        %2181 = vmatpush1.bf16.msra.mxu0 0
        %2182 = vmatprep.subr.bf16.mxu0 0
        %2183 = vmatpush1.bf16.msra.mxu0 0
        %2184 = vmatprep.subr.bf16.mxu0 0
        %2185 = vmatpush1.bf16.msra.mxu0 0
        %2186 = vmatprep.subr.bf16.mxu0 0
        %2187 = vmatpush1.bf16.msra.mxu0 0
        %2188 = vmatprep.subr.bf16.mxu0 0
        %2189 = vmatpush1.bf16.msra.mxu0 0
        %2190 = vmatprep.subr.bf16.mxu0 0
        %2191 = vmatpush1.bf16.msra.mxu0 0
        %2192 = vmatprep.mubr.bf16.mxu0 0
        %2193 = vmatmul.mubr.bf16.gmra.mrb[0].mxu0 %v2096
        %v2194 = vpop.f32.mrb[0].mxu0
        %v2195 = vadd.f32 0.0, %v2194
        %v2196 = vpop.f32.mrb[0].mxu0
        %v2197 = vpop.f32.mrb[0].mxu0
        %v2198 = vadd.f32 0.0, %v2197
        %v2199 = vpop.f32.mrb[0].mxu0
        %2200 = vmatprep.mubr.bf16.mxu0 0
        %2201 = vmatmul.mubr.bf16.gmra.mrb[0].mxu0 %v2097
        %v2202 = vpop.f32.mrb[0].mxu0
        %v2203 = vadd.f32 0.0, %v2202
        %v2204 = vpop.f32.mrb[0].mxu0
        %v2205 = vpop.f32.mrb[0].mxu0
        %v2206 = vadd.f32 0.0, %v2205
        %v2207 = vpop.f32.mrb[0].mxu0
        %2208 = vmatprep.mubr.bf16.mxu0 0
        %2209 = vmatmul.mubr.bf16.gmra.mrb[0].mxu0 %v2098
        %v2210 = vpop.f32.mrb[0].mxu0
        %v2211 = vadd.f32 0.0, %v2210
        %v2212 = vpop.f32.mrb[0].mxu0
        %v2213 = vpop.f32.mrb[0].mxu0
        %v2214 = vadd.f32 0.0, %v2213
        %v2215 = vpop.f32.mrb[0].mxu0
        %2216 = vmatprep.mubr.bf16.mxu0 0
        %2217 = vmatmul.mubr.bf16.gmra.mrb[0].mxu0 %v2099
        %v2218 = vpop.f32.mrb[0].mxu0
        %v2219 = vadd.f32 0.0, %v2218
        %v2220 = vpop.f32.mrb[0].mxu0
        %v2221 = vpop.f32.mrb[0].mxu0
        %v2222 = vadd.f32 0.0, %v2221
        %v2223 = vpop.f32.mrb[0].mxu0
        %2224 = vmatprep.mubr.bf16.mxu0 0
        %2225 = vmatmul.mubr.bf16.gmra.mrb[0].mxu0 %v2100
        %v2226 = vpop.f32.mrb[0].mxu0
        %v2227 = vadd.f32 0.0, %v2226
        %v2228 = vpop.f32.mrb[0].mxu0
        %v2229 = vpop.f32.mrb[0].mxu0
        %v2230 = vadd.f32 0.0, %v2229
        %v2231 = vpop.f32.mrb[0].mxu0
        %2232 = vmatprep.mubr.bf16.mxu0 0
        %2233 = vmatmul.mubr.bf16.gmra.mrb[0].mxu0 %v2101
        %v2234 = vpop.f32.mrb[0].mxu0
        %v2235 = vadd.f32 0.0, %v2234
        %v2236 = vpop.f32.mrb[0].mxu0
        %v2237 = vpop.f32.mrb[0].mxu0
        %v2238 = vadd.f32 0.0, %v2237
        %v2239 = vpop.f32.mrb[0].mxu0
        %2240 = vmatprep.mubr.bf16.mxu0 0
        %2241 = vmatmul.mubr.bf16.gmra.mrb[0].mxu0 %v2102
        %v2242 = vpop.f32.mrb[0].mxu0
        %v2243 = vadd.f32 0.0, %v2242
        %v2244 = vpop.f32.mrb[0].mxu0
        %v2245 = vpop.f32.mrb[0].mxu0
        %v2246 = vadd.f32 0.0, %v2245
        %v2247 = vpop.f32.mrb[0].mxu0
        %2248 = vmatprep.mubr.bf16.mxu0 0
        %2249 = vmatmul.mubr.bf16.gmra.mrb[0].mxu0 %v2103
        %v2250 = vpop.f32.mrb[0].mxu0
        %v2251 = vadd.f32 0.0, %v2250
        %v2252 = vpop.f32.mrb[0].mxu0
        %v2253 = vpop.f32.mrb[0].mxu0
        %v2254 = vadd.f32 0.0, %v2253
        %v2255 = vpop.f32.mrb[0].mxu0
        %2256 = vdwg.mxu0
        %v2273 = vunpack.c.l.b16 %v1831
        %v2274 = vunpack.c.l.b16 %v1832
        %v2275 = vunpack.c.l.b16 %v1833
        %v2276 = vunpack.c.l.b16 %v1834
        %v2277 = vunpack.c.l.b16 %v1835
        %v2278 = vunpack.c.l.b16 %v1836
        %v2279 = vunpack.c.l.b16 %v1837
        %v2280 = vunpack.c.l.b16 %v1838
        %v2281 = vunpack.c.l.b16 %v1839
        %v2282 = vunpack.c.l.b16 %v1840
        %v2283 = vunpack.c.l.b16 %v1841
        %v2284 = vunpack.c.l.b16 %v1842
        %v2285 = vunpack.c.l.b16 %v1843
        %v2286 = vunpack.c.l.b16 %v1844
        %v2287 = vunpack.c.l.b16 %v1845
        %v2288 = vunpack.c.l.b16 %v1846
        %v2289 = vpack.c.b16 %v2274, %v2273
        %v2290 = vpack.c.b16 %v2276, %v2275
        %v2291 = vpack.c.b16 %v2278, %v2277
        %v2292 = vpack.c.b16 %v2280, %v2279
        %v2293 = vpack.c.b16 %v2282, %v2281
        %v2294 = vpack.c.b16 %v2284, %v2283
        %v2295 = vpack.c.b16 %v2286, %v2285
        %v2296 = vpack.c.b16 %v2288, %v2287
        %v2321 = vunpack.c.l.b16 %v1847
        %v2322 = vunpack.c.l.b16 %v1848
        %v2323 = vunpack.c.l.b16 %v1849
        %v2324 = vunpack.c.l.b16 %v1850
        %v2325 = vunpack.c.l.b16 %v1851
        %v2326 = vunpack.c.l.b16 %v1852
        %v2327 = vunpack.c.l.b16 %v1853
        %v2328 = vunpack.c.l.b16 %v1854
        %v2329 = vunpack.c.l.b16 %v1855
        %v2330 = vunpack.c.l.b16 %v1856
        %v2331 = vunpack.c.l.b16 %v1857
        %v2332 = vunpack.c.l.b16 %v1858
        %v2333 = vunpack.c.l.b16 %v1859
        %v2334 = vunpack.c.l.b16 %v1860
        %v2335 = vunpack.c.l.b16 %v1861
        %v2336 = vunpack.c.l.b16 %v1862
        %v2337 = vpack.c.b16 %v2322, %v2321
        %v2338 = vpack.c.b16 %v2324, %v2323
        %v2339 = vpack.c.b16 %v2326, %v2325
        %v2340 = vpack.c.b16 %v2328, %v2327
        %v2341 = vpack.c.b16 %v2330, %v2329
        %v2342 = vpack.c.b16 %v2332, %v2331
        %v2343 = vpack.c.b16 %v2334, %v2333
        %v2344 = vpack.c.b16 %v2336, %v2335
        %2353 = vmatprep.subr.bf16.mxu0 0
        %2354 = vmatpush1.bf16.msra.mxu0 %v2337
        %2355 = vmatprep.subr.bf16.mxu0 0
        %2356 = vmatpush1.bf16.msra.mxu0 %v2338
        %2357 = vmatprep.subr.bf16.mxu0 0
        %2358 = vmatpush1.bf16.msra.mxu0 %v2339
        %2359 = vmatprep.subr.bf16.mxu0 0
        %2360 = vmatpush1.bf16.msra.mxu0 %v2340
        %2361 = vmatprep.subr.bf16.mxu0 0
        %2362 = vmatpush1.bf16.msra.mxu0 %v2341
        %2363 = vmatprep.subr.bf16.mxu0 0
        %2364 = vmatpush1.bf16.msra.mxu0 %v2342
        %2365 = vmatprep.subr.bf16.mxu0 0
        %2366 = vmatpush1.bf16.msra.mxu0 %v2343
        %2367 = vmatprep.subr.bf16.mxu0 0
        %2368 = vmatpush1.bf16.msra.mxu0 %v2344
        %2369 = vmatprep.subr.bf16.mxu0 0
        %2370 = vmatpush1.bf16.msra.mxu0 0
        %2371 = vmatprep.subr.bf16.mxu0 0
        %2372 = vmatpush1.bf16.msra.mxu0 0
        %2373 = vmatprep.subr.bf16.mxu0 0
        %2374 = vmatpush1.bf16.msra.mxu0 0
        %2375 = vmatprep.subr.bf16.mxu0 0
        %2376 = vmatpush1.bf16.msra.mxu0 0
        %2377 = vmatprep.subr.bf16.mxu0 0
        %2378 = vmatpush1.bf16.msra.mxu0 0
        %2379 = vmatprep.subr.bf16.mxu0 0
        %2380 = vmatpush1.bf16.msra.mxu0 0
        %2381 = vmatprep.subr.bf16.mxu0 0
        %2382 = vmatpush1.bf16.msra.mxu0 0
        %2383 = vmatprep.subr.bf16.mxu0 0
        %2384 = vmatpush1.bf16.msra.mxu0 0
        %2385 = vmatprep.mubr.bf16.mxu0 0
        %2386 = vmatmul.mubr.bf16.gmra.mrb[0].mxu0 %v2289
        %v2387 = vpop.f32.mrb[0].mxu0
        %v2388 = vadd.f32 %v2195, %v2387
        %v2389 = vpop.f32.mrb[0].mxu0
        %v2390 = vpop.f32.mrb[0].mxu0
        %v2391 = vadd.f32 %v2198, %v2390
        %v2392 = vpop.f32.mrb[0].mxu0
        %2393 = vmatprep.mubr.bf16.mxu0 0
        %2394 = vmatmul.mubr.bf16.gmra.mrb[0].mxu0 %v2290
        %v2395 = vpop.f32.mrb[0].mxu0
        %v2396 = vadd.f32 %v2203, %v2395
        %v2397 = vpop.f32.mrb[0].mxu0
        %v2398 = vpop.f32.mrb[0].mxu0
        %v2399 = vadd.f32 %v2206, %v2398
        %v2400 = vpop.f32.mrb[0].mxu0
        %2401 = vmatprep.mubr.bf16.mxu0 0
        %2402 = vmatmul.mubr.bf16.gmra.mrb[0].mxu0 %v2291
        %v2403 = vpop.f32.mrb[0].mxu0
        %v2404 = vadd.f32 %v2211, %v2403
        %v2405 = vpop.f32.mrb[0].mxu0
        %v2406 = vpop.f32.mrb[0].mxu0
        %v2407 = vadd.f32 %v2214, %v2406
        %v2408 = vpop.f32.mrb[0].mxu0
        %2409 = vmatprep.mubr.bf16.mxu0 0
        %2410 = vmatmul.mubr.bf16.gmra.mrb[0].mxu0 %v2292
        %v2411 = vpop.f32.mrb[0].mxu0
        %v2412 = vadd.f32 %v2219, %v2411
        %v2413 = vpop.f32.mrb[0].mxu0
        %v2414 = vpop.f32.mrb[0].mxu0
        %v2415 = vadd.f32 %v2222, %v2414
        %v2416 = vpop.f32.mrb[0].mxu0
        %2417 = vmatprep.mubr.bf16.mxu0 0
        %2418 = vmatmul.mubr.bf16.gmra.mrb[0].mxu0 %v2293
        %v2419 = vpop.f32.mrb[0].mxu0
        %v2420 = vadd.f32 %v2227, %v2419
        %v2421 = vpop.f32.mrb[0].mxu0
        %v2422 = vpop.f32.mrb[0].mxu0
        %v2423 = vadd.f32 %v2230, %v2422
        %v2424 = vpop.f32.mrb[0].mxu0
        %2425 = vmatprep.mubr.bf16.mxu0 0
        %2426 = vmatmul.mubr.bf16.gmra.mrb[0].mxu0 %v2294
        %v2427 = vpop.f32.mrb[0].mxu0
        %v2428 = vadd.f32 %v2235, %v2427
        %v2429 = vpop.f32.mrb[0].mxu0
        %v2430 = vpop.f32.mrb[0].mxu0
        %v2431 = vadd.f32 %v2238, %v2430
        %v2432 = vpop.f32.mrb[0].mxu0
        %2433 = vmatprep.mubr.bf16.mxu0 0
        %2434 = vmatmul.mubr.bf16.gmra.mrb[0].mxu0 %v2295
        %v2435 = vpop.f32.mrb[0].mxu0
        %v2436 = vadd.f32 %v2243, %v2435
        %v2437 = vpop.f32.mrb[0].mxu0
        %v2438 = vpop.f32.mrb[0].mxu0
        %v2439 = vadd.f32 %v2246, %v2438
        %v2440 = vpop.f32.mrb[0].mxu0
        %2441 = vmatprep.mubr.bf16.mxu0 0
        %2442 = vmatmul.mubr.bf16.gmra.mrb[0].mxu0 %v2296
        %v2443 = vpop.f32.mrb[0].mxu0
        %v2444 = vadd.f32 %v2251, %v2443
        %v2445 = vpop.f32.mrb[0].mxu0
        %v2446 = vpop.f32.mrb[0].mxu0
        %v2447 = vadd.f32 %v2254, %v2446
        %v2448 = vpop.f32.mrb[0].mxu0
        %2449 = vdwg.mxu0
        %v2450 = vld [vmem:[#allocation3] sm:$0xe]
        %v2451 = vld [vmem:[#allocation3 + $0xc] sm:$0xe]
        %v2452 = vld [vmem:[#allocation3 + $0x18] sm:$0xe]
        %v2453 = vld [vmem:[#allocation3 + $0x24] sm:$0xe]
        %v2454 = vld [vmem:[#allocation3 + $0x30] sm:$0xe]
        %v2455 = vld [vmem:[#allocation3 + $0x3c] sm:$0xe]
        %v2456 = vld [vmem:[#allocation3 + $0x48] sm:$0xe]
        %v2457 = vld [vmem:[#allocation3 + $0x54] sm:$0xe]
        %v2474 = vrot.slane %v2450, 5
        %v2475 = vrot.slane %v2474, 4
        %v2476 = vrot.slane %v1832, 5
        %v2477 = vsel %vm1213, %v2475, %v2476
        %v2478 = vrot.slane %v2476, 4
        %v2479 = vrot.slane %v1863, 5
        %v2480 = vsel %vm1213, %v2478, %v2479
        %v2481 = vrot.slane %v2451, 5
        %v2482 = vrot.slane %v2481, 4
        %v2483 = vrot.slane %v1834, 5
        %v2484 = vsel %vm1213, %v2482, %v2483
        %v2485 = vrot.slane %v2483, 4
        %v2486 = vrot.slane %v1864, 5
        %v2487 = vsel %vm1213, %v2485, %v2486
        %v2488 = vrot.slane %v2452, 5
        %v2489 = vrot.slane %v2488, 4
        %v2490 = vrot.slane %v1836, 5
        %v2491 = vsel %vm1213, %v2489, %v2490
        %v2492 = vrot.slane %v2490, 4
        %v2493 = vrot.slane %v1865, 5
        %v2494 = vsel %vm1213, %v2492, %v2493
        %v2495 = vrot.slane %v2453, 5
        %v2496 = vrot.slane %v2495, 4
        %v2497 = vrot.slane %v1838, 5
        %v2498 = vsel %vm1213, %v2496, %v2497
        %v2499 = vrot.slane %v2497, 4
        %v2500 = vrot.slane %v1866, 5
        %v2501 = vsel %vm1213, %v2499, %v2500
        %v2502 = vrot.slane %v2454, 5
        %v2503 = vrot.slane %v2502, 4
        %v2504 = vrot.slane %v1840, 5
        %v2505 = vsel %vm1213, %v2503, %v2504
        %v2506 = vrot.slane %v2504, 4
        %v2507 = vrot.slane %v1867, 5
        %v2508 = vsel %vm1213, %v2506, %v2507
        %v2509 = vrot.slane %v2455, 5
        %v2510 = vrot.slane %v2509, 4
        %v2511 = vrot.slane %v1842, 5
        %v2512 = vsel %vm1213, %v2510, %v2511
        %v2513 = vrot.slane %v2511, 4
        %v2514 = vrot.slane %v1868, 5
        %v2515 = vsel %vm1213, %v2513, %v2514
        %v2516 = vrot.slane %v2456, 5
        %v2517 = vrot.slane %v2516, 4
        %v2518 = vrot.slane %v1844, 5
        %v2519 = vsel %vm1213, %v2517, %v2518
        %v2520 = vrot.slane %v2518, 4
        %v2521 = vrot.slane %v1869, 5
        %v2522 = vsel %vm1213, %v2520, %v2521
        %v2523 = vrot.slane %v2457, 5
        %v2524 = vrot.slane %v2523, 4
        %v2525 = vrot.slane %v1846, 5
        %v2526 = vsel %vm1213, %v2524, %v2525
        %v2527 = vrot.slane %v2525, 4
        %v2528 = vrot.slane %v1870, 5
        %v2529 = vsel %vm1213, %v2527, %v2528
        %s2530 = scalar_lea.vmem [#allocation9], 128
        %v2531 = vld [vmem:[%s2530] sm:$0xf]
        %v2532 = vld [vmem:[%s2530 + $0x4] sm:$0xf]
        %v2533 = vld [vmem:[%s2530 + $0x8] sm:$0xf]
        %v2534 = vld [vmem:[%s2530 + $0xc] sm:$0xf]
        %v2535 = vld [vmem:[%s2530 + $0x10] sm:$0xf]
        %v2536 = vld [vmem:[%s2530 + $0x14] sm:$0xf]
        %v2537 = vld [vmem:[%s2530 + $0x18] sm:$0xf]
        %v2538 = vld [vmem:[%s2530 + $0x1c] sm:$0xf]
        %v2539 = vld [vmem:[%s2530 + $0x20] sm:$0xf]
        %v2540 = vld [vmem:[%s2530 + $0x24] sm:$0xf]
        %v2541 = vld [vmem:[%s2530 + $0x28] sm:$0xf]
        %v2542 = vld [vmem:[%s2530 + $0x2c] sm:$0xf]
        %v2543 = vld [vmem:[%s2530 + $0x30] sm:$0xf]
        %v2544 = vld [vmem:[%s2530 + $0x34] sm:$0xf]
        %v2545 = vld [vmem:[%s2530 + $0x38] sm:$0xf]
        %v2546 = vld [vmem:[%s2530 + $0x3c] sm:$0xf]
        %v2547 = vunpack.c.l.b16 %v2477
        %v2548 = vunpack.c.l.b16 %v2480
        %v2549 = vunpack.c.l.b16 %v2484
        %v2550 = vunpack.c.l.b16 %v2487
        %v2551 = vunpack.c.l.b16 %v2491
        %v2552 = vunpack.c.l.b16 %v2494
        %v2553 = vunpack.c.l.b16 %v2498
        %v2554 = vunpack.c.l.b16 %v2501
        %v2555 = vunpack.c.l.b16 %v2505
        %v2556 = vunpack.c.l.b16 %v2508
        %v2557 = vunpack.c.l.b16 %v2512
        %v2558 = vunpack.c.l.b16 %v2515
        %v2559 = vunpack.c.l.b16 %v2519
        %v2560 = vunpack.c.l.b16 %v2522
        %v2561 = vunpack.c.l.b16 %v2526
        %v2562 = vunpack.c.l.b16 %v2529
        %v2563 = vpack.c.b16 %v2548, %v2547
        %v2564 = vpack.c.b16 %v2550, %v2549
        %v2565 = vpack.c.b16 %v2552, %v2551
        %v2566 = vpack.c.b16 %v2554, %v2553
        %v2567 = vpack.c.b16 %v2556, %v2555
        %v2568 = vpack.c.b16 %v2558, %v2557
        %v2569 = vpack.c.b16 %v2560, %v2559
        %v2570 = vpack.c.b16 %v2562, %v2561
        %v2595 = vunpack.c.l.b16 %v2531
        %v2596 = vunpack.c.l.b16 %v2532
        %v2597 = vunpack.c.l.b16 %v2533
        %v2598 = vunpack.c.l.b16 %v2534
        %v2599 = vunpack.c.l.b16 %v2535
        %v2600 = vunpack.c.l.b16 %v2536
        %v2601 = vunpack.c.l.b16 %v2537
        %v2602 = vunpack.c.l.b16 %v2538
        %v2603 = vunpack.c.l.b16 %v2539
        %v2604 = vunpack.c.l.b16 %v2540
        %v2605 = vunpack.c.l.b16 %v2541
        %v2606 = vunpack.c.l.b16 %v2542
        %v2607 = vunpack.c.l.b16 %v2543
        %v2608 = vunpack.c.l.b16 %v2544
        %v2609 = vunpack.c.l.b16 %v2545
        %v2610 = vunpack.c.l.b16 %v2546
        %v2611 = vpack.c.b16 %v2596, %v2595
        %v2612 = vpack.c.b16 %v2598, %v2597
        %v2613 = vpack.c.b16 %v2600, %v2599
        %v2614 = vpack.c.b16 %v2602, %v2601
        %v2615 = vpack.c.b16 %v2604, %v2603
        %v2616 = vpack.c.b16 %v2606, %v2605
        %v2617 = vpack.c.b16 %v2608, %v2607
        %v2618 = vpack.c.b16 %v2610, %v2609
        %2627 = vmatprep.subr.bf16.mxu0 0
        %2628 = vmatpush1.bf16.msra.mxu0 %v2611
        %2629 = vmatprep.subr.bf16.mxu0 0
        %2630 = vmatpush1.bf16.msra.mxu0 %v2612
        %2631 = vmatprep.subr.bf16.mxu0 0
        %2632 = vmatpush1.bf16.msra.mxu0 %v2613
        %2633 = vmatprep.subr.bf16.mxu0 0
        %2634 = vmatpush1.bf16.msra.mxu0 %v2614
        %2635 = vmatprep.subr.bf16.mxu0 0
        %2636 = vmatpush1.bf16.msra.mxu0 %v2615
        %2637 = vmatprep.subr.bf16.mxu0 0
        %2638 = vmatpush1.bf16.msra.mxu0 %v2616
        %2639 = vmatprep.subr.bf16.mxu0 0
        %2640 = vmatpush1.bf16.msra.mxu0 %v2617
        %2641 = vmatprep.subr.bf16.mxu0 0
        %2642 = vmatpush1.bf16.msra.mxu0 %v2618
        %2643 = vmatprep.subr.bf16.mxu0 0
        %2644 = vmatpush1.bf16.msra.mxu0 0
        %2645 = vmatprep.subr.bf16.mxu0 0
        %2646 = vmatpush1.bf16.msra.mxu0 0
        %2647 = vmatprep.subr.bf16.mxu0 0
        %2648 = vmatpush1.bf16.msra.mxu0 0
        %2649 = vmatprep.subr.bf16.mxu0 0
        %2650 = vmatpush1.bf16.msra.mxu0 0
        %2651 = vmatprep.subr.bf16.mxu0 0
        %2652 = vmatpush1.bf16.msra.mxu0 0
        %2653 = vmatprep.subr.bf16.mxu0 0
        %2654 = vmatpush1.bf16.msra.mxu0 0
        %2655 = vmatprep.subr.bf16.mxu0 0
        %2656 = vmatpush1.bf16.msra.mxu0 0
        %2657 = vmatprep.subr.bf16.mxu0 0
        %2658 = vmatpush1.bf16.msra.mxu0 0
        %2659 = vmatprep.mubr.bf16.mxu0 0
        %2660 = vmatmul.mubr.bf16.gmra.mrb[0].mxu0 %v2563
        %v2661 = vpop.f32.mrb[0].mxu0
        %v2662 = vadd.f32 0.0, %v2661
        %v2663 = vpop.f32.mrb[0].mxu0
        %v2664 = vpop.f32.mrb[0].mxu0
        %v2665 = vadd.f32 0.0, %v2664
        %v2666 = vpop.f32.mrb[0].mxu0
        %2667 = vmatprep.mubr.bf16.mxu0 0
        %2668 = vmatmul.mubr.bf16.gmra.mrb[0].mxu0 %v2564
        %v2669 = vpop.f32.mrb[0].mxu0
        %v2670 = vadd.f32 0.0, %v2669
        %v2671 = vpop.f32.mrb[0].mxu0
        %v2672 = vpop.f32.mrb[0].mxu0
        %v2673 = vadd.f32 0.0, %v2672
        %v2674 = vpop.f32.mrb[0].mxu0
        %2675 = vmatprep.mubr.bf16.mxu0 0
        %2676 = vmatmul.mubr.bf16.gmra.mrb[0].mxu0 %v2565
        %v2677 = vpop.f32.mrb[0].mxu0
        %v2678 = vadd.f32 0.0, %v2677
        %v2679 = vpop.f32.mrb[0].mxu0
        %v2680 = vpop.f32.mrb[0].mxu0
        %v2681 = vadd.f32 0.0, %v2680
        %v2682 = vpop.f32.mrb[0].mxu0
        %2683 = vmatprep.mubr.bf16.mxu0 0
        %2684 = vmatmul.mubr.bf16.gmra.mrb[0].mxu0 %v2566
        %v2685 = vpop.f32.mrb[0].mxu0
        %v2686 = vadd.f32 0.0, %v2685
        %v2687 = vpop.f32.mrb[0].mxu0
        %v2688 = vpop.f32.mrb[0].mxu0
        %v2689 = vadd.f32 0.0, %v2688
        %v2690 = vpop.f32.mrb[0].mxu0
        %2691 = vmatprep.mubr.bf16.mxu0 0
        %2692 = vmatmul.mubr.bf16.gmra.mrb[0].mxu0 %v2567
        %v2693 = vpop.f32.mrb[0].mxu0
        %v2694 = vadd.f32 0.0, %v2693
        %v2695 = vpop.f32.mrb[0].mxu0
        %v2696 = vpop.f32.mrb[0].mxu0
        %v2697 = vadd.f32 0.0, %v2696
        %v2698 = vpop.f32.mrb[0].mxu0
        %2699 = vmatprep.mubr.bf16.mxu0 0
        %2700 = vmatmul.mubr.bf16.gmra.mrb[0].mxu0 %v2568
        %v2701 = vpop.f32.mrb[0].mxu0
        %v2702 = vadd.f32 0.0, %v2701
        %v2703 = vpop.f32.mrb[0].mxu0
        %v2704 = vpop.f32.mrb[0].mxu0
        %v2705 = vadd.f32 0.0, %v2704
        %v2706 = vpop.f32.mrb[0].mxu0
        %2707 = vmatprep.mubr.bf16.mxu0 0
        %2708 = vmatmul.mubr.bf16.gmra.mrb[0].mxu0 %v2569
        %v2709 = vpop.f32.mrb[0].mxu0
        %v2710 = vadd.f32 0.0, %v2709
        %v2711 = vpop.f32.mrb[0].mxu0
        %v2712 = vpop.f32.mrb[0].mxu0
        %v2713 = vadd.f32 0.0, %v2712
        %v2714 = vpop.f32.mrb[0].mxu0
        %2715 = vmatprep.mubr.bf16.mxu0 0
        %2716 = vmatmul.mubr.bf16.gmra.mrb[0].mxu0 %v2570
        %v2717 = vpop.f32.mrb[0].mxu0
        %v2718 = vadd.f32 0.0, %v2717
        %v2719 = vpop.f32.mrb[0].mxu0
        %v2720 = vpop.f32.mrb[0].mxu0
        %v2721 = vadd.f32 0.0, %v2720
        %v2722 = vpop.f32.mrb[0].mxu0
        %2723 = vdwg.mxu0
        %v2724 = vadd.f32 %v2388, %v2662
        %v2725 = vadd.f32 %v2391, %v2665
        %v2726 = vadd.f32 %v2396, %v2670
        %v2727 = vadd.f32 %v2399, %v2673
        %v2728 = vadd.f32 %v2404, %v2678
        %v2729 = vadd.f32 %v2407, %v2681
        %v2730 = vadd.f32 %v2412, %v2686
        %v2731 = vadd.f32 %v2415, %v2689
        %v2732 = vadd.f32 %v2420, %v2694
        %v2733 = vadd.f32 %v2423, %v2697
        %v2734 = vadd.f32 %v2428, %v2702
        %v2735 = vadd.f32 %v2431, %v2705
        %v2736 = vadd.f32 %v2436, %v2710
        %v2737 = vadd.f32 %v2439, %v2713
        %v2738 = vadd.f32 %v2444, %v2718
        %v2739 = vadd.f32 %v2447, %v2721
        %v2740 = vld [vmem:[%s4] sm:$0x1]
        %v2742 = vlaneseq
        %v2743 = vshrl.u32 %v2742, 7
        %v2744 = vsub.s32 0, %v2743
        %v2745 = vrot.slane %v2740, %v2744
        %v2747 = vadd.f32 %v2724, %v2745
        %v2748 = vadd.f32 %v2725, %v2745
        %v2749 = vadd.f32 %v2726, %v2745
        %v2750 = vadd.f32 %v2727, %v2745
        %v2751 = vadd.f32 %v2728, %v2745
        %v2752 = vadd.f32 %v2729, %v2745
        %v2753 = vadd.f32 %v2730, %v2745
        %v2754 = vadd.f32 %v2731, %v2745
        %v2755 = vadd.f32 %v2732, %v2745
        %v2756 = vadd.f32 %v2733, %v2745
        %v2757 = vadd.f32 %v2734, %v2745
        %v2758 = vadd.f32 %v2735, %v2745
        %v2759 = vadd.f32 %v2736, %v2745
        %v2760 = vadd.f32 %v2737, %v2745
        %v2761 = vadd.f32 %v2738, %v2745
        %v2762 = vadd.f32 %v2739, %v2745
        %v2763 = vunpack.c.l.bf16 %v276
        %v2764 = vunpack.c.l.bf16 %v277
        %v2765 = vunpack.c.l.bf16 %v278
        %v2766 = vunpack.c.l.bf16 %v279
        %v2767 = vunpack.c.l.bf16 %v280
        %v2768 = vunpack.c.l.bf16 %v281
        %v2769 = vunpack.c.l.bf16 %v282
        %v2770 = vunpack.c.l.bf16 %v283
        %v2771 = vunpack.c.l.bf16 %v284
        %v2772 = vunpack.c.l.bf16 %v285
        %v2773 = vunpack.c.l.bf16 %v286
        %v2774 = vunpack.c.l.bf16 %v287
        %v2775 = vunpack.c.l.bf16 %v288
        %v2776 = vunpack.c.l.bf16 %v289
        %v2777 = vunpack.c.l.bf16 %v290
        %v2778 = vunpack.c.l.bf16 %v291
        %v2779 = vadd.f32 %v2747, %v2763
        %v2780 = vadd.f32 %v2748, %v2764
        %v2781 = vadd.f32 %v2749, %v2765
        %v2782 = vadd.f32 %v2750, %v2766
        %v2783 = vadd.f32 %v2751, %v2767
        %v2784 = vadd.f32 %v2752, %v2768
        %v2785 = vadd.f32 %v2753, %v2769
        %v2786 = vadd.f32 %v2754, %v2770
        %v2787 = vadd.f32 %v2755, %v2771
        %v2788 = vadd.f32 %v2756, %v2772
        %v2789 = vadd.f32 %v2757, %v2773
        %v2790 = vadd.f32 %v2758, %v2774
        %v2791 = vadd.f32 %v2759, %v2775
        %v2792 = vadd.f32 %v2760, %v2776
        %v2793 = vadd.f32 %v2761, %v2777
        %v2794 = vadd.f32 %v2762, %v2778
        %v2795 = vmax.f32 %v2779, 0.0
        %v2796 = vmax.f32 %v2780, 0.0
        %v2797 = vmax.f32 %v2781, 0.0
        %v2798 = vmax.f32 %v2782, 0.0
        %v2799 = vmax.f32 %v2783, 0.0
        %v2800 = vmax.f32 %v2784, 0.0
        %v2801 = vmax.f32 %v2785, 0.0
        %v2802 = vmax.f32 %v2786, 0.0
        %v2803 = vmax.f32 %v2787, 0.0
        %v2804 = vmax.f32 %v2788, 0.0
        %v2805 = vmax.f32 %v2789, 0.0
        %v2806 = vmax.f32 %v2790, 0.0
        %v2807 = vmax.f32 %v2791, 0.0
        %v2808 = vmax.f32 %v2792, 0.0
        %v2809 = vmax.f32 %v2793, 0.0
        %v2810 = vmax.f32 %v2794, 0.0
        %v2811 = vpack.c.bf16 %v2796, %v2795
        %v2812 = vpack.c.bf16 %v2798, %v2797
        %v2813 = vpack.c.bf16 %v2800, %v2799
        %v2814 = vpack.c.bf16 %v2802, %v2801
        %v2815 = vpack.c.bf16 %v2804, %v2803
        %v2816 = vpack.c.bf16 %v2806, %v2805
        %v2817 = vpack.c.bf16 %v2808, %v2807
        %v2818 = vpack.c.bf16 %v2810, %v2809
        %v2827 = vunpack.c.l.b16 %v2811
        %v2828 = vunpack.c.h.b16 %v2811
        %v2829 = vunpack.c.l.b16 %v2812
        %v2830 = vunpack.c.h.b16 %v2812
        %v2831 = vunpack.c.l.b16 %v2813
        %v2832 = vunpack.c.h.b16 %v2813
        %v2833 = vunpack.c.l.b16 %v2814
        %v2834 = vunpack.c.h.b16 %v2814
        %v2835 = vunpack.c.l.b16 %v2815
        %v2836 = vunpack.c.h.b16 %v2815
        %v2837 = vunpack.c.l.b16 %v2816
        %v2838 = vunpack.c.h.b16 %v2816
        %v2839 = vunpack.c.l.b16 %v2817
        %v2840 = vunpack.c.h.b16 %v2817
        %v2841 = vunpack.c.l.b16 %v2818
        %v2842 = vunpack.c.h.b16 %v2818
        %v2843 = vpack.c.b16 %v2827, %v2827
        %v2844 = vpack.c.b16 %v2828, %v2828
        %v2845 = vpack.c.b16 %v2829, %v2829
        %v2846 = vpack.c.b16 %v2830, %v2830
        %v2847 = vpack.c.b16 %v2831, %v2831
        %v2848 = vpack.c.b16 %v2832, %v2832
        %v2849 = vpack.c.b16 %v2833, %v2833
        %v2850 = vpack.c.b16 %v2834, %v2834
        %v2851 = vpack.c.b16 %v2835, %v2835
        %v2852 = vpack.c.b16 %v2836, %v2836
        %v2853 = vpack.c.b16 %v2837, %v2837
        %v2854 = vpack.c.b16 %v2838, %v2838
        %v2855 = vpack.c.b16 %v2839, %v2839
        %v2856 = vpack.c.b16 %v2840, %v2840
        %v2857 = vpack.c.b16 %v2841, %v2841
        %v2858 = vpack.c.b16 %v2842, %v2842
        %2875 = vst [vmem:[%s272] sm:$0xf] %v2843
        %2876 = vst [vmem:[%s272 + $0x4] sm:$0xf] %v2844
        %2877 = vst [vmem:[%s272 + $0x8] sm:$0xf] %v2845
        %2878 = vst [vmem:[%s272 + $0xc] sm:$0xf] %v2846
        %2879 = vst [vmem:[%s272 + $0x10] sm:$0xf] %v2847
        %2880 = vst [vmem:[%s272 + $0x14] sm:$0xf] %v2848
        %2881 = vst [vmem:[%s272 + $0x18] sm:$0xf] %v2849
        %2882 = vst [vmem:[%s272 + $0x1c] sm:$0xf] %v2850
        %2883 = vst [vmem:[%s272 + $0x20] sm:$0xf] %v2851
        %2884 = vst [vmem:[%s272 + $0x24] sm:$0xf] %v2852
        %2885 = vst [vmem:[%s272 + $0x28] sm:$0xf] %v2853
        %2886 = vst [vmem:[%s272 + $0x2c] sm:$0xf] %v2854
        %2887 = vst [vmem:[%s272 + $0x30] sm:$0xf] %v2855
        %2888 = vst [vmem:[%s272 + $0x34] sm:$0xf] %v2856
        %2889 = vst [vmem:[%s272 + $0x38] sm:$0xf] %v2857
        %2890 = vst [vmem:[%s272 + $0x3c] sm:$0xf] %v2858
        %s2891 = sand.u32 %s141, 1
        %s2892 = scalar_lea.sflag [#allocation6], %s2891
        %s2893 = sand.u32 %s141, 1
        %s2894 = smul.addr %s2893, 64
        %s2895 = scalar_lea.vmem [#allocation10], %s2894
        // Predicated region
        $region53: #{tpu_custom_call.1} parent=39 // pred_check
          %p2896 = pneg %p151
        $region54: #{tpu_custom_call.1} parent=39 // pred_check_branch
          %2898 = sbr.rel (%p2896) target = $region56
        $region55: #{tpu_custom_call.1} parent=39 // pred_region
          %s2899 = smul.u32 8, %s23
          %s2901 = ssub.s32 1024, 1024
          %2902 = vsyncadd %s2892, %s2901
          %s2903 = smul.addr %s2899, 2
          %s2904 = smul.addr %s2903, 64
          %s2905 = scalar_lea.hbm %s5, %s2904
          %s2906 = sshll.u32 %s2895, 4
          %s2907 = int_to_ptr.vmem [resolvable:$true] %s2906
          %2912 = dma.vmem_to_hbm [thread:$0]  %s2907, 1024, %s2905, %s2892, 64, 64, 4
        $region56: #{tpu_custom_call.1} parent=39 // pred_fallthru
          _
      $region40: #{tpu_custom_call.1} parent=5 // pred_fallthru
        _
      %p2913 = scmp.le.s32.totalorder 2, %s18
      // Predicated region
      $region57: #{tpu_custom_call.1} parent=5 // pred_check
        %p2914 = pneg %p2913
      $region58: #{tpu_custom_call.1} parent=5 // pred_check_branch
        %2916 = sbr.rel (%p2914) target = $region60
      $region59: #{tpu_custom_call.1} parent=5 // pred_region
        %s2917 = ssub.s32 %s18, 2
        // Predicated region
        $region61: #{tpu_custom_call.1} parent=59 // pred_check
          %p2918 = pneg %p157
        $region62: #{tpu_custom_call.1} parent=59 // pred_check_branch
          %2920 = sbr.rel (%p2918) target = $region64
        $region63: #{tpu_custom_call.1} parent=59 // pred_region
          %s2921 = sand.u32 %s142, 1
          %s2922 = scalar_lea.sflag [#allocation6], %s2921
          %s2923 = sand.u32 %s142, 1
          %s2924 = smul.addr %s2923, 64
          %s2925 = scalar_lea.vmem [#allocation10], %s2924
          %2926 = dma.done %s2922, 1024
        $region64: #{tpu_custom_call.1} parent=59 // pred_fallthru
          _
      $region60: #{tpu_custom_call.1} parent=5 // pred_fallthru
        _
    $region6: #{tpu_custom_call.1} parent=1 // loop_footer
      %s22 = sadd.s32 1, %s18
    $region7: #{tpu_custom_call.1} parent=1 // loop_footer_branch
      %17 = sbr.rel target = $region3
    $region8: #{tpu_custom_call.1} parent=1 // loop_exit
      _
    %2927 = vsyncpa [#allocation5], 1
    %s2928 = scalar_lea.sflag [#allocation5], 1
    %2929 = vsyncpa %s2928, 1
    %2930 = vsyncpa [#allocation8], 1
    %2931 = vsyncpa [#allocation6], 1
    %s2932 = scalar_lea.sflag [#allocation6], 1
    %2933 = vsyncpa %s2932, 1

</llo_original>
